<compile_context>
chip_gen: v7x
topology: tpu7x:2x2x1
jax: 0.10.0
libtpu: 0.0.40
codegen_flags: <defaults>
</compile_context>

<pallas_src>
import jax
import jax.numpy as jnp
from jax import lax
from jax.experimental import pallas as pl
from jax.experimental.pallas import tpu as pltpu

# ---- synthetic tiny-BERT config (small shapes) ----
B, S, H = 2, 8, 32           # batch, seq len, hidden size
N_HEADS, D_HEAD = 4, 8       # H = N_HEADS * D_HEAD
FFN = 64                     # intermediate size
VOCAB = 50                   # vocabulary size
N_CLASSES = 12               # classifier output size
C_PAD = 128                  # lane-dense padded class dimension
LN_EPS = 1e-12
NEG_INF = -1e9
VROWS = 16                   # rows of the packed per-channel vector slab

# row indices inside the packed [VROWS, 128] vector slab
R_GE, R_BE, R_BO, R_G1, R_B1, R_BI, R_BO2, R_G2, R_B2, R_BC = range(10)


def _layer_norm(x, g, b):
    mu = jnp.mean(x, axis=-1, keepdims=True)
    var = jnp.mean((x - mu) ** 2, axis=-1, keepdims=True)
    return (x - mu) * lax.rsqrt(var + LN_EPS) * g + b


def bert_classifier_kernel(
    x_ref,       # [1, S, H]   f32  embeddings (pre-LN) for this sequence
    mask_ref,    # [1, 1, S]   f32  key mask for this sequence
    vecs_ref,    # [VROWS,128] f32  packed LN gains/biases + linear biases
    wqkv_ref,    # [N_HEADS, H, 3*D_HEAD] bf16  head-major fused QKV (Q pre-scaled)
    bqkv_ref,    # [N_HEADS, 1, 3*D_HEAD] f32   head-major fused QKV bias (Q pre-scaled)
    wo_ref,      # [N_HEADS, D_HEAD, H]   bf16  head-major attention output proj
    wi_ref,      # [H, FFN]    bf16
    wo2_ref,     # [FFN, H]    bf16
    wc_ref,      # [H, C_PAD]  bf16  classifier (padded cols zero)
    out_ref,     # [1, 1, C_PAD] f32 log-probabilities (padded)
):
    bf16 = jnp.bfloat16
    f32 = jnp.float32

    vecs = vecs_ref[...]                               # one load of the slab
    g_e, b_e = vecs[R_GE:R_GE + 1, :H], vecs[R_BE:R_BE + 1, :H]
    bo       = vecs[R_BO:R_BO + 1, :H]
    g1, b1   = vecs[R_G1:R_G1 + 1, :H], vecs[R_B1:R_B1 + 1, :H]
    bi       = vecs[R_BI:R_BI + 1, :FFN]
    bo2      = vecs[R_BO2:R_BO2 + 1, :H]
    g2, b2   = vecs[R_G2:R_G2 + 1, :H], vecs[R_B2:R_B2 + 1, :H]
    bc       = vecs[R_BC:R_BC + 1, :]                  # padded cols carry -1e9

    # ---- embedding LayerNorm (f32) ----
    h0 = _layer_norm(x_ref[0], g_e, b_e)               # [S, H]

    # ---- multi-head self-attention, heads as an explicit batch dim ----
    h_b = jnp.broadcast_to(h0.astype(bf16)[None], (N_HEADS, S, H))
    qkv = lax.dot_general(                             # [N, S, 3D] f32
        h_b, wqkv_ref[...],
        dimension_numbers=(((2,), (1,)), ((0,), (0,))),
        preferred_element_type=f32) + bqkv_ref[...]
    qh = qkv[:, :, :D_HEAD]                            # scale pre-folded into Q
    kh = qkv[:, :, D_HEAD:2 * D_HEAD]
    vh = qkv[:, :, 2 * D_HEAD:]

    s = lax.dot_general(                               # [N, S, S] scores
        qh.astype(bf16), kh.astype(bf16),
        dimension_numbers=(((2,), (2,)), ((0,), (0,))),
        preferred_element_type=f32)
    s = s + jnp.where(mask_ref[...] > 0.0, 0.0, NEG_INF)   # key mask, in-kernel
    s = s - jnp.max(s, axis=-1, keepdims=True)
    e = jnp.exp(s)
    p = e * pl.reciprocal(jnp.sum(e, axis=-1, keepdims=True), approx=True)

    ctx = lax.dot_general(                             # [N, S, D]
        p.astype(bf16), vh.astype(bf16),
        dimension_numbers=(((2,), (1,)), ((0,), (0,))),
        preferred_element_type=f32)
    attn_heads = lax.dot_general(                      # [N, S, H]
        ctx.astype(bf16), wo_ref[...],
        dimension_numbers=(((2,), (1,)), ((0,), (0,))),
        preferred_element_type=f32)
    attn_out = jnp.sum(attn_heads, axis=0) + bo        # [S, H]
    h1 = _layer_norm(h0 + attn_out, g1, b1)

    # ---- feed-forward block ----
    inter = jnp.dot(h1.astype(bf16), wi_ref[...],
                    preferred_element_type=f32) + bi
    # TODO(synk): HF/PyTorch BERT default is exact (erf) GELU; tanh
    # approximation used here for guaranteed Mosaic lowering.
    inter = jax.nn.gelu(inter, approximate=True)
    ffn_out = jnp.dot(inter.astype(bf16), wo2_ref[...],
                      preferred_element_type=f32) + bo2
    h2 = _layer_norm(h1 + ffn_out, g2, b2)

    # ---- h.mean(1): in-kernel mean over the sequence axis ----
    pooled = jnp.mean(h2, axis=0, keepdims=True)       # [1, H]

    # ---- classifier (num_layers=1 -> single Linear) + log_softmax(dim=1) ----
    logits = jnp.dot(pooled.astype(bf16), wc_ref[...],
                     preferred_element_type=f32) + bc  # [1, C_PAD]
    z = logits - jnp.max(logits, axis=-1, keepdims=True)
    logp = z - jnp.log(jnp.sum(jnp.exp(z), axis=-1, keepdims=True))
    out_ref[...] = logp.reshape(1, 1, C_PAD)


def init_params(key):
    ks = jax.random.split(key, 10)
    std = 0.02
    w = lambda k, shp: jax.random.normal(k, shp, jnp.float32) * std
    ones = lambda shp: jnp.ones(shp, jnp.float32)
    zeros = lambda shp: jnp.zeros(shp, jnp.float32)
    return {
        "word_emb": w(ks[0], (VOCAB, H)),
        "pos_emb": w(ks[1], (S, H)),
        "type_emb": w(ks[2], (2, H)),
        "ln_e_g": ones((1, H)), "ln_e_b": zeros((1, H)),
        "wq": w(ks[3], (H, H)), "bq": zeros((1, H)),
        "wk": w(ks[4], (H, H)), "bk": zeros((1, H)),
        "wv": w(ks[5], (H, H)), "bv": zeros((1, H)),
        "wo": w(ks[6], (H, H)), "bo": zeros((1, H)),
        "ln1_g": ones((1, H)), "ln1_b": zeros((1, H)),
        "wi": w(ks[7], (H, FFN)), "bi": zeros((1, FFN)),
        "wo2": w(ks[8], (FFN, H)), "bo2": zeros((1, H)),
        "ln2_g": ones((1, H)), "ln2_b": zeros((1, H)),
        "wc": w(ks[9], (H, N_CLASSES)), "bc": zeros((1, N_CLASSES)),
    }


def pack_params(params):
    """One-time weight transform (NOT per-call): head-major layouts, fused QKV,
    bf16 casts, scale folding, lane-dense classifier padding, and packing of
    all small per-channel vectors into a single [VROWS,128] slab (one DMA)."""
    bf16 = jnp.bfloat16
    scale = 1.0 / (D_HEAD ** 0.5)

    def w_heads(w):                     # [H, H] -> [N_HEADS, H, D_HEAD]
        return jnp.transpose(w.reshape(H, N_HEADS, D_HEAD), (1, 0, 2))

    def b_heads(b):                     # [1, H] -> [N_HEADS, 1, D_HEAD]
        return b.reshape(N_HEADS, 1, D_HEAD)

    wqkv_h = jnp.concatenate(
        [w_heads(params["wq"]) * scale, w_heads(params["wk"]),
         w_heads(params["wv"])], axis=-1).astype(bf16)            # [N, H, 3D]
    bqkv_h = jnp.concatenate(
        [b_heads(params["bq"]) * scale, b_heads(params["bk"]),
         b_heads(params["bv"])], axis=-1).astype(jnp.float32)     # [N, 1, 3D]
    wo_h = params["wo"].reshape(N_HEADS, D_HEAD, H).astype(bf16)  # [N, D, H]

    wc_pad = (jnp.zeros((H, C_PAD), jnp.float32)
              .at[:, :N_CLASSES].set(params["wc"]).astype(bf16))
    bc_pad = (jnp.full((128,), NEG_INF, jnp.float32)
              .at[:N_CLASSES].set(params["bc"].reshape(-1)))

    def row(v):
        v = v.reshape(-1).astype(jnp.float32)
        return jnp.zeros((128,), jnp.float32).at[:v.shape[0]].set(v)

    rows = [None] * 10
    rows[R_GE], rows[R_BE] = row(params["ln_e_g"]), row(params["ln_e_b"])
    rows[R_BO] = row(params["bo"])
    rows[R_G1], rows[R_B1] = row(params["ln1_g"]), row(params["ln1_b"])
    rows[R_BI] = row(params["bi"])
    rows[R_BO2] = row(params["bo2"])
    rows[R_G2], rows[R_B2] = row(params["ln2_g"]), row(params["ln2_b"])
    rows[R_BC] = bc_pad
    vecs = (jnp.zeros((VROWS, 128), jnp.float32)
            .at[:len(rows)].set(jnp.stack(rows, axis=0)))

    return {
        "word_emb": params["word_emb"],
        "pos_emb": params["pos_emb"],
        "type_emb": params["type_emb"],
        "vecs": vecs,
        "wqkv_h": wqkv_h, "bqkv_h": bqkv_h, "wo_h": wo_h,
        "wi": params["wi"].astype(bf16),
        "wo2": params["wo2"].astype(bf16),
        "wc": wc_pad,
    }


@jax.jit
def bert_classifier_forward(token_ids, mask, packed):
    # Embedding lookup is glue in plain JAX (gather); all dense compute runs
    # inside the Pallas kernel. Weights arrive pre-packed (pack_params).
    emb = (packed["word_emb"][token_ids]
           + packed["pos_emb"][None, :, :]
           + packed["type_emb"][0][None, None, :]).astype(jnp.float32)  # [B,S,H]
    mask3 = mask.reshape(B, 1, S).astype(jnp.float32)                   # [B,1,S]

    out_pad = pl.pallas_call(
        bert_classifier_kernel,
        grid=(B,),                                    # one sequence per step
        in_specs=[
            pl.BlockSpec((1, S, H), lambda b: (b, 0, 0)),            # x
            pl.BlockSpec((1, 1, S), lambda b: (b, 0, 0)),            # key mask
            pl.BlockSpec((VROWS, 128), lambda b: (0, 0)),            # vec slab
            pl.BlockSpec((N_HEADS, H, 3 * D_HEAD), lambda b: (0, 0, 0)),
            pl.BlockSpec((N_HEADS, 1, 3 * D_HEAD), lambda b: (0, 0, 0)),
            pl.BlockSpec((N_HEADS, D_HEAD, H), lambda b: (0, 0, 0)),
            pl.BlockSpec((H, FFN), lambda b: (0, 0)),
            pl.BlockSpec((FFN, H), lambda b: (0, 0)),
            pl.BlockSpec((H, C_PAD), lambda b: (0, 0)),
        ],
        out_specs=pl.BlockSpec((1, 1, C_PAD), lambda b: (b, 0, 0)),
        out_shape=jax.ShapeDtypeStruct((B, 1, C_PAD), jnp.float32),
        compiler_params=pltpu.CompilerParams(
            dimension_semantics=("parallel",)),       # megacore on v7x
    )(emb, mask3, packed["vecs"], packed["wqkv_h"], packed["bqkv_h"],
      packed["wo_h"], packed["wi"], packed["wo2"], packed["wc"])

    return out_pad[:, 0, :N_CLASSES]


if __name__ == "__main__":
    key = jax.random.PRNGKey(0)
    pkey, xkey = jax.random.split(key)
    params = init_params(pkey)
    packed = pack_params(params)          # one-time weight transform

    token_ids = jax.random.randint(xkey, (B, S), 0, VOCAB, dtype=jnp.int32)
    mask = jnp.ones((B, S), jnp.float32)

    out = bert_classifier_forward(token_ids, mask, packed)
    out = jax.block_until_ready(out)
    assert out.shape == (B, N_CLASSES)
    # rows of log-probabilities must each sum to ~1 in prob space
    assert jnp.allclose(jnp.exp(out).sum(axis=1), 1.0, atol=1e-4)
    print("KERNEL_OK")
</pallas_src>

<mosaic_0001>
module attributes {stable_mosaic.version = 11 : i64} {
  func.func @bert_classifier_kernel(%arg0: i32, %arg1: memref<1x8x32xf32, #tpu.memory_space<vmem>>, %arg2: memref<1x1x8xf32, #tpu.memory_space<vmem>>, %arg3: memref<16x128xf32, #tpu.memory_space<vmem>>, %arg4: memref<4x32x24xbf16, #tpu.memory_space<vmem>>, %arg5: memref<4x1x24xf32, #tpu.memory_space<vmem>>, %arg6: memref<4x8x32xbf16, #tpu.memory_space<vmem>>, %arg7: memref<32x64xbf16, #tpu.memory_space<vmem>>, %arg8: memref<64x32xbf16, #tpu.memory_space<vmem>>, %arg9: memref<32x128xbf16, #tpu.memory_space<vmem>>, %arg10: memref<1x1x128xf32, #tpu.memory_space<vmem>>) attributes {dimension_semantics = [#tpu.dimension_semantics<parallel>], iteration_bounds = array<i64: 2>, scalar_prefetch = 0 : i64, scratch_operands = 0 : i64, tpu.core_type = #tpu.core_type<tc>, window_params = [{transform_indices = @transform_0, window_bounds = array<i64: 1, 8, 32>}, {transform_indices = @transform_1, window_bounds = array<i64: 1, 1, 8>}, {pipeline_mode = #tpu.pipeline_mode<synchronous>, transform_indices = @transform_2, window_bounds = array<i64: 16, 128>}, {pipeline_mode = #tpu.pipeline_mode<synchronous>, transform_indices = @transform_3, window_bounds = array<i64: 4, 32, 24>}, {pipeline_mode = #tpu.pipeline_mode<synchronous>, transform_indices = @transform_4, window_bounds = array<i64: 4, 1, 24>}, {pipeline_mode = #tpu.pipeline_mode<synchronous>, transform_indices = @transform_5, window_bounds = array<i64: 4, 8, 32>}, {pipeline_mode = #tpu.pipeline_mode<synchronous>, transform_indices = @transform_6, window_bounds = array<i64: 32, 64>}, {pipeline_mode = #tpu.pipeline_mode<synchronous>, transform_indices = @transform_7, window_bounds = array<i64: 64, 32>}, {pipeline_mode = #tpu.pipeline_mode<synchronous>, transform_indices = @transform_8, window_bounds = array<i64: 32, 128>}, {transform_indices = @transform_9, window_bounds = array<i64: 1, 1, 128>}]} {
    %c0 = arith.constant 0 : index
    %c0_0 = arith.constant 0 : index
    %0 = vector.load %arg3[%c0, %c0_0] : memref<16x128xf32, #tpu.memory_space<vmem>>, vector<16x128xf32>
    %1 = vector.extract_strided_slice %0 {offsets = [0, 0], sizes = [1, 32], strides = [1, 1]} : vector<16x128xf32> to vector<1x32xf32>
    %2 = vector.extract_strided_slice %0 {offsets = [1, 0], sizes = [1, 32], strides = [1, 1]} : vector<16x128xf32> to vector<1x32xf32>
    %3 = vector.extract_strided_slice %0 {offsets = [2, 0], sizes = [1, 32], strides = [1, 1]} : vector<16x128xf32> to vector<1x32xf32>
    %4 = vector.extract_strided_slice %0 {offsets = [3, 0], sizes = [1, 32], strides = [1, 1]} : vector<16x128xf32> to vector<1x32xf32>
    %5 = vector.extract_strided_slice %0 {offsets = [4, 0], sizes = [1, 32], strides = [1, 1]} : vector<16x128xf32> to vector<1x32xf32>
    %6 = vector.extract_strided_slice %0 {offsets = [5, 0], sizes = [1, 64], strides = [1, 1]} : vector<16x128xf32> to vector<1x64xf32>
    %7 = vector.extract_strided_slice %0 {offsets = [6, 0], sizes = [1, 32], strides = [1, 1]} : vector<16x128xf32> to vector<1x32xf32>
    %8 = vector.extract_strided_slice %0 {offsets = [7, 0], sizes = [1, 32], strides = [1, 1]} : vector<16x128xf32> to vector<1x32xf32>
    %9 = vector.extract_strided_slice %0 {offsets = [8, 0], sizes = [1, 32], strides = [1, 1]} : vector<16x128xf32> to vector<1x32xf32>
    %10 = vector.extract_strided_slice %0 {offsets = [9, 0], sizes = [1, 128], strides = [1, 1]} : vector<16x128xf32> to vector<1x128xf32>
    %c0_1 = arith.constant 0 : index
    %c0_2 = arith.constant 0 : index
    %c0_3 = arith.constant 0 : index
    %11 = vector.load %arg1[%c0_1, %c0_2, %c0_3] : memref<1x8x32xf32, #tpu.memory_space<vmem>>, vector<1x8x32xf32>
    %12 = vector.shape_cast %11 : vector<1x8x32xf32> to vector<8x32xf32>
    %cst = arith.constant dense<0.000000e+00> : vector<8xf32>
    %13 = vector.multi_reduction <add>, %12, %cst [1] : vector<8x32xf32> to vector<8xf32>
    %14 = vector.shape_cast %13 : vector<8xf32> to vector<8x1xf32>
    %cst_4 = arith.constant 3.200000e+01 : f32
    %15 = vector.broadcast %cst_4 : f32 to vector<8x1xf32>
    %16 = arith.divf %14, %15 : vector<8x1xf32>
    %17 = vector.broadcast %16 : vector<8x1xf32> to vector<8x32xf32>
    %18 = arith.subf %12, %17 : vector<8x32xf32>
    %19 = arith.mulf %18, %18 : vector<8x32xf32>
    %cst_5 = arith.constant dense<0.000000e+00> : vector<8xf32>
    %20 = vector.multi_reduction <add>, %19, %cst_5 [1] : vector<8x32xf32> to vector<8xf32>
    %21 = vector.shape_cast %20 : vector<8xf32> to vector<8x1xf32>
    %cst_6 = arith.constant 3.200000e+01 : f32
    %22 = vector.broadcast %cst_6 : f32 to vector<8x1xf32>
    %23 = arith.divf %21, %22 : vector<8x1xf32>
    %24 = vector.broadcast %16 : vector<8x1xf32> to vector<8x32xf32>
    %25 = arith.subf %12, %24 : vector<8x32xf32>
    %cst_7 = arith.constant 9.99999996E-13 : f32
    %26 = vector.broadcast %cst_7 : f32 to vector<8x1xf32>
    %27 = arith.addf %23, %26 : vector<8x1xf32>
    %28 = math.rsqrt %27 : vector<8x1xf32>
    %29 = vector.broadcast %28 : vector<8x1xf32> to vector<8x32xf32>
    %30 = arith.mulf %25, %29 : vector<8x32xf32>
    %31 = vector.broadcast %1 : vector<1x32xf32> to vector<8x32xf32>
    %32 = arith.mulf %30, %31 : vector<8x32xf32>
    %33 = vector.broadcast %2 : vector<1x32xf32> to vector<8x32xf32>
    %34 = arith.addf %32, %33 : vector<8x32xf32>
    %35 = arith.truncf %34 : vector<8x32xf32> to vector<8x32xbf16>
    %36 = vector.shape_cast %35 : vector<8x32xbf16> to vector<1x8x32xbf16>
    %37 = vector.shape_cast %36 : vector<1x8x32xbf16> to vector<1x8x32xbf16>
    %38 = vector.broadcast %37 : vector<1x8x32xbf16> to vector<4x8x32xbf16>
    %c0_8 = arith.constant 0 : index
    %c0_9 = arith.constant 0 : index
    %c0_10 = arith.constant 0 : index
    %39 = vector.load %arg4[%c0_8, %c0_9, %c0_10] : memref<4x32x24xbf16, #tpu.memory_space<vmem>>, vector<4x32x24xbf16>
    %cst_11 = arith.constant dense<0.000000e+00> : vector<4x8x24xf32>
    %40 = tpu.matmul %38, %39, %cst_11 {dimension_numbers = #tpu.dot_dimension_numbers<[2], [1], [1], [2], [0, 0, 0, 1, 1, 2], [0], [0]>} : vector<4x8x32xbf16>, vector<4x32x24xbf16>, vector<4x8x24xf32> -> vector<4x8x24xf32>
    %c0_12 = arith.constant 0 : index
    %c0_13 = arith.constant 0 : index
    %c0_14 = arith.constant 0 : index
    %41 = vector.load %arg5[%c0_12, %c0_13, %c0_14] : memref<4x1x24xf32, #tpu.memory_space<vmem>>, vector<4x1x24xf32>
    %42 = vector.broadcast %41 : vector<4x1x24xf32> to vector<4x8x24xf32>
    %43 = arith.addf %40, %42 : vector<4x8x24xf32>
    %44 = vector.extract_strided_slice %43 {offsets = [0, 0, 0], sizes = [4, 8, 8], strides = [1, 1, 1]} : vector<4x8x24xf32> to vector<4x8x8xf32>
    %45 = vector.extract_strided_slice %43 {offsets = [0, 0, 8], sizes = [4, 8, 8], strides = [1, 1, 1]} : vector<4x8x24xf32> to vector<4x8x8xf32>
    %46 = vector.extract_strided_slice %43 {offsets = [0, 0, 16], sizes = [4, 8, 8], strides = [1, 1, 1]} : vector<4x8x24xf32> to vector<4x8x8xf32>
    %47 = arith.truncf %44 : vector<4x8x8xf32> to vector<4x8x8xbf16>
    %48 = arith.truncf %45 : vector<4x8x8xf32> to vector<4x8x8xbf16>
    %cst_15 = arith.constant dense<0.000000e+00> : vector<4x8x8xf32>
    %49 = tpu.matmul %47, %48, %cst_15 {dimension_numbers = #tpu.dot_dimension_numbers<[2], [2], [1], [1], [0, 0, 0, 1, 1, 1], [0], [0]>} : vector<4x8x8xbf16>, vector<4x8x8xbf16>, vector<4x8x8xf32> -> vector<4x8x8xf32>
    %c0_16 = arith.constant 0 : index
    %c0_17 = arith.constant 0 : index
    %c0_18 = arith.constant 0 : index
    %50 = vector.load %arg2[%c0_16, %c0_17, %c0_18] : memref<1x1x8xf32, #tpu.memory_space<vmem>>, vector<1x1x8xf32>
    %cst_19 = arith.constant 0.000000e+00 : f32
    %51 = vector.broadcast %cst_19 : f32 to vector<1x1x8xf32>
    %52 = arith.cmpf ogt, %50, %51 : vector<1x1x8xf32>
    %cst_20 = arith.constant 0.000000e+00 : f32
    %cst_21 = arith.constant -1.000000e+09 : f32
    %53 = vector.broadcast %cst_20 : f32 to vector<1x1x8xf32>
    %54 = vector.broadcast %cst_21 : f32 to vector<1x1x8xf32>
    %55 = arith.select %52, %53, %54 : vector<1x1x8xi1>, vector<1x1x8xf32>
    %56 = vector.broadcast %55 : vector<1x1x8xf32> to vector<4x8x8xf32>
    %57 = arith.addf %49, %56 : vector<4x8x8xf32>
    %cst_22 = arith.constant dense<0xFF800000> : vector<4x8xf32>
    %58 = vector.multi_reduction <maximumf>, %57, %cst_22 [2] : vector<4x8x8xf32> to vector<4x8xf32>
    %59 = vector.shape_cast %58 : vector<4x8xf32> to vector<4x8x1xf32>
    %60 = vector.broadcast %59 : vector<4x8x1xf32> to vector<4x8x8xf32>
    %61 = arith.subf %57, %60 : vector<4x8x8xf32>
    %62 = math.exp %61 : vector<4x8x8xf32>
    %cst_23 = arith.constant dense<0.000000e+00> : vector<4x8xf32>
    %63 = vector.multi_reduction <add>, %62, %cst_23 [2] : vector<4x8x8xf32> to vector<4x8xf32>
    %64 = vector.shape_cast %63 : vector<4x8xf32> to vector<4x8x1xf32>
    %65 = tpu.reciprocal %64 {approx = true} : vector<4x8x1xf32> -> vector<4x8x1xf32>
    %66 = vector.broadcast %65 : vector<4x8x1xf32> to vector<4x8x8xf32>
    %67 = arith.mulf %62, %66 : vector<4x8x8xf32>
    %68 = arith.truncf %67 : vector<4x8x8xf32> to vector<4x8x8xbf16>
    %69 = arith.truncf %46 : vector<4x8x8xf32> to vector<4x8x8xbf16>
    %cst_24 = arith.constant dense<0.000000e+00> : vector<4x8x8xf32>
    %70 = tpu.matmul %68, %69, %cst_24 {dimension_numbers = #tpu.dot_dimension_numbers<[2], [1], [1], [2], [0, 0, 0, 1, 1, 2], [0], [0]>} : vector<4x8x8xbf16>, vector<4x8x8xbf16>, vector<4x8x8xf32> -> vector<4x8x8xf32>
    %71 = arith.truncf %70 : vector<4x8x8xf32> to vector<4x8x8xbf16>
    %c0_25 = arith.constant 0 : index
    %c0_26 = arith.constant 0 : index
    %c0_27 = arith.constant 0 : index
    %72 = vector.load %arg6[%c0_25, %c0_26, %c0_27] : memref<4x8x32xbf16, #tpu.memory_space<vmem>>, vector<4x8x32xbf16>
    %cst_28 = arith.constant dense<0.000000e+00> : vector<4x8x32xf32>
    %73 = tpu.matmul %71, %72, %cst_28 {dimension_numbers = #tpu.dot_dimension_numbers<[2], [1], [1], [2], [0, 0, 0, 1, 1, 2], [0], [0]>} : vector<4x8x8xbf16>, vector<4x8x32xbf16>, vector<4x8x32xf32> -> vector<4x8x32xf32>
    %cst_29 = arith.constant dense<0.000000e+00> : vector<8x32xf32>
    %74 = vector.multi_reduction <add>, %73, %cst_29 [0] : vector<4x8x32xf32> to vector<8x32xf32>
    %75 = vector.broadcast %3 : vector<1x32xf32> to vector<8x32xf32>
    %76 = arith.addf %74, %75 : vector<8x32xf32>
    %77 = arith.addf %34, %76 : vector<8x32xf32>
    %cst_30 = arith.constant dense<0.000000e+00> : vector<8xf32>
    %78 = vector.multi_reduction <add>, %77, %cst_30 [1] : vector<8x32xf32> to vector<8xf32>
    %79 = vector.shape_cast %78 : vector<8xf32> to vector<8x1xf32>
    %cst_31 = arith.constant 3.200000e+01 : f32
    %80 = vector.broadcast %cst_31 : f32 to vector<8x1xf32>
    %81 = arith.divf %79, %80 : vector<8x1xf32>
    %82 = vector.broadcast %81 : vector<8x1xf32> to vector<8x32xf32>
    %83 = arith.subf %77, %82 : vector<8x32xf32>
    %84 = arith.mulf %83, %83 : vector<8x32xf32>
    %cst_32 = arith.constant dense<0.000000e+00> : vector<8xf32>
    %85 = vector.multi_reduction <add>, %84, %cst_32 [1] : vector<8x32xf32> to vector<8xf32>
    %86 = vector.shape_cast %85 : vector<8xf32> to vector<8x1xf32>
    %cst_33 = arith.constant 3.200000e+01 : f32
    %87 = vector.broadcast %cst_33 : f32 to vector<8x1xf32>
    %88 = arith.divf %86, %87 : vector<8x1xf32>
    %89 = vector.broadcast %81 : vector<8x1xf32> to vector<8x32xf32>
    %90 = arith.subf %77, %89 : vector<8x32xf32>
    %cst_34 = arith.constant 9.99999996E-13 : f32
    %91 = vector.broadcast %cst_34 : f32 to vector<8x1xf32>
    %92 = arith.addf %88, %91 : vector<8x1xf32>
    %93 = math.rsqrt %92 : vector<8x1xf32>
    %94 = vector.broadcast %93 : vector<8x1xf32> to vector<8x32xf32>
    %95 = arith.mulf %90, %94 : vector<8x32xf32>
    %96 = vector.broadcast %4 : vector<1x32xf32> to vector<8x32xf32>
    %97 = arith.mulf %95, %96 : vector<8x32xf32>
    %98 = vector.broadcast %5 : vector<1x32xf32> to vector<8x32xf32>
    %99 = arith.addf %97, %98 : vector<8x32xf32>
    %100 = arith.truncf %99 : vector<8x32xf32> to vector<8x32xbf16>
    %c0_35 = arith.constant 0 : index
    %c0_36 = arith.constant 0 : index
    %101 = vector.load %arg7[%c0_35, %c0_36] : memref<32x64xbf16, #tpu.memory_space<vmem>>, vector<32x64xbf16>
    %cst_37 = arith.constant dense<0.000000e+00> : vector<8x64xf32>
    %102 = tpu.matmul %100, %101, %cst_37 {dimension_numbers = #tpu.dot_dimension_numbers<[1], [0], [0], [1], [0, 0, 1, 1], [], []>} : vector<8x32xbf16>, vector<32x64xbf16>, vector<8x64xf32> -> vector<8x64xf32>
    %103 = vector.broadcast %6 : vector<1x64xf32> to vector<8x64xf32>
    %104 = arith.addf %102, %103 : vector<8x64xf32>
    %105 = arith.mulf %104, %104 : vector<8x64xf32>
    %106 = arith.mulf %104, %105 : vector<8x64xf32>
    %cst_38 = arith.constant 4.471500e-02 : f32
    %107 = vector.broadcast %cst_38 : f32 to vector<8x64xf32>
    %108 = arith.mulf %107, %106 : vector<8x64xf32>
    %109 = arith.addf %104, %108 : vector<8x64xf32>
    %cst_39 = arith.constant 0.797884583 : f32
    %110 = vector.broadcast %cst_39 : f32 to vector<8x64xf32>
    %111 = arith.mulf %110, %109 : vector<8x64xf32>
    %112 = math.tanh %111 : vector<8x64xf32>
    %cst_40 = arith.constant 1.000000e+00 : f32
    %113 = vector.broadcast %cst_40 : f32 to vector<8x64xf32>
    %114 = arith.addf %113, %112 : vector<8x64xf32>
    %cst_41 = arith.constant 5.000000e-01 : f32
    %115 = vector.broadcast %cst_41 : f32 to vector<8x64xf32>
    %116 = arith.mulf %115, %114 : vector<8x64xf32>
    %117 = arith.mulf %104, %116 : vector<8x64xf32>
    %118 = arith.truncf %117 : vector<8x64xf32> to vector<8x64xbf16>
    %c0_42 = arith.constant 0 : index
    %c0_43 = arith.constant 0 : index
    %119 = vector.load %arg8[%c0_42, %c0_43] : memref<64x32xbf16, #tpu.memory_space<vmem>>, vector<64x32xbf16>
    %cst_44 = arith.constant dense<0.000000e+00> : vector<8x32xf32>
    %120 = tpu.matmul %118, %119, %cst_44 {dimension_numbers = #tpu.dot_dimension_numbers<[1], [0], [0], [1], [0, 0, 1, 1], [], []>} : vector<8x64xbf16>, vector<64x32xbf16>, vector<8x32xf32> -> vector<8x32xf32>
    %121 = vector.broadcast %7 : vector<1x32xf32> to vector<8x32xf32>
    %122 = arith.addf %120, %121 : vector<8x32xf32>
    %123 = arith.addf %99, %122 : vector<8x32xf32>
    %cst_45 = arith.constant dense<0.000000e+00> : vector<8xf32>
    %124 = vector.multi_reduction <add>, %123, %cst_45 [1] : vector<8x32xf32> to vector<8xf32>
    %125 = vector.shape_cast %124 : vector<8xf32> to vector<8x1xf32>
    %cst_46 = arith.constant 3.200000e+01 : f32
    %126 = vector.broadcast %cst_46 : f32 to vector<8x1xf32>
    %127 = arith.divf %125, %126 : vector<8x1xf32>
    %128 = vector.broadcast %127 : vector<8x1xf32> to vector<8x32xf32>
    %129 = arith.subf %123, %128 : vector<8x32xf32>
    %130 = arith.mulf %129, %129 : vector<8x32xf32>
    %cst_47 = arith.constant dense<0.000000e+00> : vector<8xf32>
    %131 = vector.multi_reduction <add>, %130, %cst_47 [1] : vector<8x32xf32> to vector<8xf32>
    %132 = vector.shape_cast %131 : vector<8xf32> to vector<8x1xf32>
    %cst_48 = arith.constant 3.200000e+01 : f32
    %133 = vector.broadcast %cst_48 : f32 to vector<8x1xf32>
    %134 = arith.divf %132, %133 : vector<8x1xf32>
    %135 = vector.broadcast %127 : vector<8x1xf32> to vector<8x32xf32>
    %136 = arith.subf %123, %135 : vector<8x32xf32>
    %cst_49 = arith.constant 9.99999996E-13 : f32
    %137 = vector.broadcast %cst_49 : f32 to vector<8x1xf32>
    %138 = arith.addf %134, %137 : vector<8x1xf32>
    %139 = math.rsqrt %138 : vector<8x1xf32>
    %140 = vector.broadcast %139 : vector<8x1xf32> to vector<8x32xf32>
    %141 = arith.mulf %136, %140 : vector<8x32xf32>
    %142 = vector.broadcast %8 : vector<1x32xf32> to vector<8x32xf32>
    %143 = arith.mulf %141, %142 : vector<8x32xf32>
    %144 = vector.broadcast %9 : vector<1x32xf32> to vector<8x32xf32>
    %145 = arith.addf %143, %144 : vector<8x32xf32>
    %cst_50 = arith.constant dense<0.000000e+00> : vector<32xf32>
    %146 = vector.multi_reduction <add>, %145, %cst_50 [0] : vector<8x32xf32> to vector<32xf32>
    %147 = vector.shape_cast %146 : vector<32xf32> to vector<1x32xf32>
    %cst_51 = arith.constant 8.000000e+00 : f32
    %148 = vector.broadcast %cst_51 : f32 to vector<1x32xf32>
    %149 = arith.divf %147, %148 : vector<1x32xf32>
    %150 = arith.truncf %149 : vector<1x32xf32> to vector<1x32xbf16>
    %c0_52 = arith.constant 0 : index
    %c0_53 = arith.constant 0 : index
    %151 = vector.load %arg9[%c0_52, %c0_53] : memref<32x128xbf16, #tpu.memory_space<vmem>>, vector<32x128xbf16>
    %cst_54 = arith.constant dense<0.000000e+00> : vector<1x128xf32>
    %152 = tpu.matmul %150, %151, %cst_54 {dimension_numbers = #tpu.dot_dimension_numbers<[1], [0], [0], [1], [0, 0, 1, 1], [], []>} : vector<1x32xbf16>, vector<32x128xbf16>, vector<1x128xf32> -> vector<1x128xf32>
    %153 = arith.addf %152, %10 : vector<1x128xf32>
    %cst_55 = arith.constant dense<0xFF800000> : vector<1xf32>
    %154 = vector.multi_reduction <maximumf>, %153, %cst_55 [1] : vector<1x128xf32> to vector<1xf32>
    %155 = vector.shape_cast %154 : vector<1xf32> to vector<1x1xf32>
    %156 = vector.broadcast %155 : vector<1x1xf32> to vector<1x128xf32>
    %157 = arith.subf %153, %156 : vector<1x128xf32>
    %158 = math.exp %157 : vector<1x128xf32>
    %cst_56 = arith.constant dense<0.000000e+00> : vector<1xf32>
    %159 = vector.multi_reduction <add>, %158, %cst_56 [1] : vector<1x128xf32> to vector<1xf32>
    %160 = vector.shape_cast %159 : vector<1xf32> to vector<1x1xf32>
    %161 = math.log %160 : vector<1x1xf32>
    %162 = vector.broadcast %161 : vector<1x1xf32> to vector<1x128xf32>
    %163 = arith.subf %157, %162 : vector<1x128xf32>
    %164 = vector.shape_cast %163 : vector<1x128xf32> to vector<1x1x128xf32>
    %c0_57 = arith.constant 0 : index
    %c0_58 = arith.constant 0 : index
    %c0_59 = arith.constant 0 : index
    %165 = vector.load %arg10[%c0_57, %c0_58, %c0_59] : memref<1x1x128xf32, #tpu.memory_space<vmem>>, vector<1x1x128xf32>
    tpu.vector_store %arg10[%c0_57, %c0_58, %c0_59], %164 {strides = array<i32>} : memref<1x1x128xf32, #tpu.memory_space<vmem>>, vector<1x1x128xf32>,
    return
  }
  func.func @transform_0(%arg0: i32) -> (i32, i32, i32) {
    %c0_i32 = arith.constant 0 : i32
    %c0_i32_0 = arith.constant 0 : i32
    %c0_i32_1 = arith.constant 0 : i32
    return %arg0, %c0_i32, %c0_i32_0 : i32, i32, i32
  }
  func.func @transform_1(%arg0: i32) -> (i32, i32, i32) {
    %c0_i32 = arith.constant 0 : i32
    %c0_i32_0 = arith.constant 0 : i32
    %c0_i32_1 = arith.constant 0 : i32
    return %arg0, %c0_i32, %c0_i32_0 : i32, i32, i32
  }
  func.func @transform_2(%arg0: i32) -> (i32, i32) {
    %c0_i32 = arith.constant 0 : i32
    %c0_i32_0 = arith.constant 0 : i32
    %c0_i32_1 = arith.constant 0 : i32
    return %c0_i32, %c0_i32_0 : i32, i32
  }
  func.func @transform_3(%arg0: i32) -> (i32, i32, i32) {
    %c0_i32 = arith.constant 0 : i32
    %c0_i32_0 = arith.constant 0 : i32
    %c0_i32_1 = arith.constant 0 : i32
    %c0_i32_2 = arith.constant 0 : i32
    return %c0_i32, %c0_i32_0, %c0_i32_1 : i32, i32, i32
  }
  func.func @transform_4(%arg0: i32) -> (i32, i32, i32) {
    %c0_i32 = arith.constant 0 : i32
    %c0_i32_0 = arith.constant 0 : i32
    %c0_i32_1 = arith.constant 0 : i32
    %c0_i32_2 = arith.constant 0 : i32
    return %c0_i32, %c0_i32_0, %c0_i32_1 : i32, i32, i32
  }
  func.func @transform_5(%arg0: i32) -> (i32, i32, i32) {
    %c0_i32 = arith.constant 0 : i32
    %c0_i32_0 = arith.constant 0 : i32
    %c0_i32_1 = arith.constant 0 : i32
    %c0_i32_2 = arith.constant 0 : i32
    return %c0_i32, %c0_i32_0, %c0_i32_1 : i32, i32, i32
  }
  func.func @transform_6(%arg0: i32) -> (i32, i32) {
    %c0_i32 = arith.constant 0 : i32
    %c0_i32_0 = arith.constant 0 : i32
    %c0_i32_1 = arith.constant 0 : i32
    return %c0_i32, %c0_i32_0 : i32, i32
  }
  func.func @transform_7(%arg0: i32) -> (i32, i32) {
    %c0_i32 = arith.constant 0 : i32
    %c0_i32_0 = arith.constant 0 : i32
    %c0_i32_1 = arith.constant 0 : i32
    return %c0_i32, %c0_i32_0 : i32, i32
  }
  func.func @transform_8(%arg0: i32) -> (i32, i32) {
    %c0_i32 = arith.constant 0 : i32
    %c0_i32_0 = arith.constant 0 : i32
    %c0_i32_1 = arith.constant 0 : i32
    return %c0_i32, %c0_i32_0 : i32, i32
  }
  func.func @transform_9(%arg0: i32) -> (i32, i32, i32) {
    %c0_i32 = arith.constant 0 : i32
    %c0_i32_0 = arith.constant 0 : i32
    %c0_i32_1 = arith.constant 0 : i32
    return %arg0, %c0_i32, %c0_i32_0 : i32, i32, i32
  }
}

</mosaic_0001>

<llo_original>
// kernel: bert_classifier_forward.1
$region0: #{bert_classifier_forward.1}
  #allocation0 [shape = 'u32[]', space=smem, size = 0x4, offset = 0x4, fixed_abs, tag = 'smem constant byte address 0x4 - core index']
  #allocation1 [shape = 'u32[144,128]{1,0:T(1,128)}', space=vmem, size = 0x12000, scoped, tag = 'internal scratch']
  %s0 = inlined_call_operand.vmem [shape: f32[2,8,32], index: 0, kind: input, shape index: {}]
  %s1 = inlined_call_operand.vmem [shape: f32[2,1,8], index: 1, kind: input, shape index: {}]
  %s2 = inlined_call_operand.vmem [shape: f32[16,128], index: 2, kind: input, shape index: {}]
  %s3 = inlined_call_operand.vmem [shape: bf16[4,32,24], index: 3, kind: input, shape index: {}]
  %s4 = inlined_call_operand.vmem [shape: f32[4,1,24], index: 4, kind: input, shape index: {}]
  %s5 = inlined_call_operand.vmem [shape: bf16[4,8,32], index: 5, kind: input, shape index: {}]
  %s6 = inlined_call_operand.vmem [shape: bf16[32,64], index: 6, kind: input, shape index: {}]
  %s7 = inlined_call_operand.vmem [shape: bf16[64,32], index: 7, kind: input, shape index: {}]
  %s8 = inlined_call_operand.vmem [shape: bf16[32,128], index: 8, kind: input, shape index: {}]
  %s9 = inlined_call_operand.hbm [shape: f32[2,1,128], index: 9, kind: output, shape index: {}]
  %s10 = sld [smem:[#allocation0]]
  $region69: #{bert_classifier_forward.1} parent=0
    _
  %s12 = ssub.s32 1, %s10
  %s13 = scalar_select 0, %s12, %s10
  $region1: #{bert_classifier_forward.1} parent=0
    #allocation2 [shape = 'u8[1024]{0}', space=vmem, size = 0x400, scoped, tag = 'output window, operand 0']
    #allocation3 [shape = 's32[2]{0}', space=sflag, size = 0x8, scoped, tag = 'scoped memory for bert_classifier_forward.1']
    %14 = vsyncpa [#allocation3], 0
    %s15 = scalar_lea.sflag [#allocation3], 1
    %16 = vsyncpa %s15, 0
    loop: start=0, step=1, limit=4
    $region2: #{bert_classifier_forward.1} parent=1 // loop_pre_header
      _
    $region3: #{bert_classifier_forward.1} parent=1 // loop_header
      %s18 = sphi 0, %s22
      %p19 = scmp.ge.s32.totalorder %s18, 4
      %s28 = sphi 0, %s30
      %s31 = sphi 0, %s28
      %s32 = sphi 0, %s31
      %s48 = sphi 0, %s32
      %s54 = sphi 0, %s56
      %s57 = sphi 0, %s54
      %s58 = sphi 0, %s57
      %s74 = sphi 0, %s58
      %s78 = sphi 0, %s78
      %s80 = sphi 0, %s78
      %s81 = sphi 0, %s80
      %s95 = sphi 0, %s81
      %s99 = sphi 0, %s99
      %s101 = sphi 0, %s99
      %s102 = sphi 0, %s101
      %s116 = sphi 0, %s102
      %s120 = sphi 0, %s120
      %s122 = sphi 0, %s120
      %s123 = sphi 0, %s122
      %s137 = sphi 0, %s123
      %s141 = sphi 0, %s141
      %s143 = sphi 0, %s141
      %s144 = sphi 0, %s143
      %s158 = sphi 0, %s144
      %s162 = sphi 0, %s162
      %s164 = sphi 0, %s162
      %s165 = sphi 0, %s164
      %s179 = sphi 0, %s165
      %s183 = sphi 0, %s183
      %s185 = sphi 0, %s183
      %s186 = sphi 0, %s185
      %s200 = sphi 0, %s186
      %s204 = sphi 0, %s204
      %s206 = sphi 0, %s204
      %s207 = sphi 0, %s206
      %s221 = sphi 0, %s207
      %s227 = sphi 0, %s229
      %s230 = sphi 0, %s227
      %s231 = sphi 0, %s230
      %s247 = sphi 0, %s231
    $region4: #{bert_classifier_forward.1} parent=1 // loop_header_branch
      %21 = sbr.rel (%p19) target = $region8
    $region5: #{bert_classifier_forward.1} parent=1 // loop_body
      %s23 = ssub.s32 %s18, 1
      %s24 = ssub.s32 %s18, 2
      %s25 = sadd.s32 %s18, 1
      %s26 = ssub.s32 %s18, %s25
      %p27 = scmp.eq.s32.totalorder %s26, 0
      %s29 = sadd.s32 %s28, 1
      %s30 = scalar_select %p27, %s28, %s29
      %p33 = pneg %p27
      %p34 = scmp.eq.s32.totalorder %s18, 1
      %p35 = por %p33, %p34
      %p36 = scmp.ne.s32.totalorder %s28, %s31
      %p37 = scmp.eq.s32.totalorder %s18, 0
      %p38 = por %p36, %p37
      %p39 = scmp.ne.s32.totalorder %s28, %s31
      %p40 = scmp.eq.s32.totalorder %s23, 1
      %p41 = por %p39, %p40
      %p42 = scmp.ne.s32.totalorder %s31, %s32
      %p43 = scmp.eq.s32.totalorder %s23, 0
      %p44 = por %p42, %p43
      %p45 = scmp.ne.s32.totalorder %s31, %s32
      %p46 = scmp.eq.s32.totalorder %s24, 1
      %p47 = por %p45, %p46
      %p49 = scmp.ne.s32.totalorder %s32, %s48
      %p50 = scmp.eq.s32.totalorder %s24, 0
      %p51 = por %p49, %p50
      %s52 = ssub.s32 %s18, %s25
      %p53 = scmp.eq.s32.totalorder %s52, 0
      %s55 = sadd.s32 %s54, 1
      %s56 = scalar_select %p53, %s54, %s55
      %p59 = pneg %p53
      %p60 = scmp.eq.s32.totalorder %s18, 1
      %p61 = por %p59, %p60
      %p62 = scmp.ne.s32.totalorder %s54, %s57
      %p63 = scmp.eq.s32.totalorder %s18, 0
      %p64 = por %p62, %p63
      %p65 = scmp.ne.s32.totalorder %s54, %s57
      %p66 = scmp.eq.s32.totalorder %s23, 1
      %p67 = por %p65, %p66
      %p68 = scmp.ne.s32.totalorder %s57, %s58
      %p69 = scmp.eq.s32.totalorder %s23, 0
      %p70 = por %p68, %p69
      %p71 = scmp.ne.s32.totalorder %s57, %s58
      %p72 = scmp.eq.s32.totalorder %s24, 1
      %p73 = por %p71, %p72
      %p75 = scmp.ne.s32.totalorder %s58, %s74
      %p76 = scmp.eq.s32.totalorder %s24, 0
      %p77 = por %p75, %p76
      %s79 = sadd.s32 %s78, 1
      %p82 = scmp.eq.s32.totalorder %s18, 1
      %p83 = scmp.ne.s32.totalorder %s78, %s80
      %p84 = scmp.eq.s32.totalorder %s18, 0
      %p85 = por %p83, %p84
      %p86 = scmp.ne.s32.totalorder %s78, %s80
      %p87 = scmp.eq.s32.totalorder %s23, 1
      %p88 = por %p86, %p87
      %p89 = scmp.ne.s32.totalorder %s80, %s81
      %p90 = scmp.eq.s32.totalorder %s23, 0
      %p91 = por %p89, %p90
      %p92 = scmp.ne.s32.totalorder %s80, %s81
      %p93 = scmp.eq.s32.totalorder %s24, 1
      %p94 = por %p92, %p93
      %p96 = scmp.ne.s32.totalorder %s81, %s95
      %p97 = scmp.eq.s32.totalorder %s24, 0
      %p98 = por %p96, %p97
      %s100 = sadd.s32 %s99, 1
      %p103 = scmp.eq.s32.totalorder %s18, 1
      %p104 = scmp.ne.s32.totalorder %s99, %s101
      %p105 = scmp.eq.s32.totalorder %s18, 0
      %p106 = por %p104, %p105
      %p107 = scmp.ne.s32.totalorder %s99, %s101
      %p108 = scmp.eq.s32.totalorder %s23, 1
      %p109 = por %p107, %p108
      %p110 = scmp.ne.s32.totalorder %s101, %s102
      %p111 = scmp.eq.s32.totalorder %s23, 0
      %p112 = por %p110, %p111
      %p113 = scmp.ne.s32.totalorder %s101, %s102
      %p114 = scmp.eq.s32.totalorder %s24, 1
      %p115 = por %p113, %p114
      %p117 = scmp.ne.s32.totalorder %s102, %s116
      %p118 = scmp.eq.s32.totalorder %s24, 0
      %p119 = por %p117, %p118
      %s121 = sadd.s32 %s120, 1
      %p124 = scmp.eq.s32.totalorder %s18, 1
      %p125 = scmp.ne.s32.totalorder %s120, %s122
      %p126 = scmp.eq.s32.totalorder %s18, 0
      %p127 = por %p125, %p126
      %p128 = scmp.ne.s32.totalorder %s120, %s122
      %p129 = scmp.eq.s32.totalorder %s23, 1
      %p130 = por %p128, %p129
      %p131 = scmp.ne.s32.totalorder %s122, %s123
      %p132 = scmp.eq.s32.totalorder %s23, 0
      %p133 = por %p131, %p132
      %p134 = scmp.ne.s32.totalorder %s122, %s123
      %p135 = scmp.eq.s32.totalorder %s24, 1
      %p136 = por %p134, %p135
      %p138 = scmp.ne.s32.totalorder %s123, %s137
      %p139 = scmp.eq.s32.totalorder %s24, 0
      %p140 = por %p138, %p139
      %s142 = sadd.s32 %s141, 1
      %p145 = scmp.eq.s32.totalorder %s18, 1
      %p146 = scmp.ne.s32.totalorder %s141, %s143
      %p147 = scmp.eq.s32.totalorder %s18, 0
      %p148 = por %p146, %p147
      %p149 = scmp.ne.s32.totalorder %s141, %s143
      %p150 = scmp.eq.s32.totalorder %s23, 1
      %p151 = por %p149, %p150
      %p152 = scmp.ne.s32.totalorder %s143, %s144
      %p153 = scmp.eq.s32.totalorder %s23, 0
      %p154 = por %p152, %p153
      %p155 = scmp.ne.s32.totalorder %s143, %s144
      %p156 = scmp.eq.s32.totalorder %s24, 1
      %p157 = por %p155, %p156
      %p159 = scmp.ne.s32.totalorder %s144, %s158
      %p160 = scmp.eq.s32.totalorder %s24, 0
      %p161 = por %p159, %p160
      %s163 = sadd.s32 %s162, 1
      %p166 = scmp.eq.s32.totalorder %s18, 1
      %p167 = scmp.ne.s32.totalorder %s162, %s164
      %p168 = scmp.eq.s32.totalorder %s18, 0
      %p169 = por %p167, %p168
      %p170 = scmp.ne.s32.totalorder %s162, %s164
      %p171 = scmp.eq.s32.totalorder %s23, 1
      %p172 = por %p170, %p171
      %p173 = scmp.ne.s32.totalorder %s164, %s165
      %p174 = scmp.eq.s32.totalorder %s23, 0
      %p175 = por %p173, %p174
      %p176 = scmp.ne.s32.totalorder %s164, %s165
      %p177 = scmp.eq.s32.totalorder %s24, 1
      %p178 = por %p176, %p177
      %p180 = scmp.ne.s32.totalorder %s165, %s179
      %p181 = scmp.eq.s32.totalorder %s24, 0
      %p182 = por %p180, %p181
      %s184 = sadd.s32 %s183, 1
      %p187 = scmp.eq.s32.totalorder %s18, 1
      %p188 = scmp.ne.s32.totalorder %s183, %s185
      %p189 = scmp.eq.s32.totalorder %s18, 0
      %p190 = por %p188, %p189
      %p191 = scmp.ne.s32.totalorder %s183, %s185
      %p192 = scmp.eq.s32.totalorder %s23, 1
      %p193 = por %p191, %p192
      %p194 = scmp.ne.s32.totalorder %s185, %s186
      %p195 = scmp.eq.s32.totalorder %s23, 0
      %p196 = por %p194, %p195
      %p197 = scmp.ne.s32.totalorder %s185, %s186
      %p198 = scmp.eq.s32.totalorder %s24, 1
      %p199 = por %p197, %p198
      %p201 = scmp.ne.s32.totalorder %s186, %s200
      %p202 = scmp.eq.s32.totalorder %s24, 0
      %p203 = por %p201, %p202
      %s205 = sadd.s32 %s204, 1
      %p208 = scmp.eq.s32.totalorder %s18, 1
      %p209 = scmp.ne.s32.totalorder %s204, %s206
      %p210 = scmp.eq.s32.totalorder %s18, 0
      %p211 = por %p209, %p210
      %p212 = scmp.ne.s32.totalorder %s204, %s206
      %p213 = scmp.eq.s32.totalorder %s23, 1
      %p214 = por %p212, %p213
      %p215 = scmp.ne.s32.totalorder %s206, %s207
      %p216 = scmp.eq.s32.totalorder %s23, 0
      %p217 = por %p215, %p216
      %p218 = scmp.ne.s32.totalorder %s206, %s207
      %p219 = scmp.eq.s32.totalorder %s24, 1
      %p220 = por %p218, %p219
      %p222 = scmp.ne.s32.totalorder %s207, %s221
      %p223 = scmp.eq.s32.totalorder %s24, 0
      %p224 = por %p222, %p223
      %s225 = ssub.s32 %s18, %s25
      %p226 = scmp.eq.s32.totalorder %s225, 0
      %s228 = sadd.s32 %s227, 1
      %s229 = scalar_select %p226, %s227, %s228
      %p232 = pneg %p226
      %p233 = scmp.eq.s32.totalorder %s18, 1
      %p234 = por %p232, %p233
      %p235 = scmp.ne.s32.totalorder %s227, %s230
      %p236 = scmp.eq.s32.totalorder %s18, 0
      %p237 = por %p235, %p236
      %p238 = scmp.ne.s32.totalorder %s227, %s230
      %p239 = scmp.eq.s32.totalorder %s23, 1
      %p240 = por %p238, %p239
      %p241 = scmp.ne.s32.totalorder %s230, %s231
      %p242 = scmp.eq.s32.totalorder %s23, 0
      %p243 = por %p241, %p242
      %p244 = scmp.ne.s32.totalorder %s230, %s231
      %p245 = scmp.eq.s32.totalorder %s24, 1
      %p246 = por %p244, %p245
      %p248 = scmp.ne.s32.totalorder %s231, %s247
      %p249 = scmp.eq.s32.totalorder %s24, 0
      %p250 = por %p248, %p249
      %p251 = scmp.le.s32.totalorder 1, %s18
      %p252 = scmp.lt.s32.totalorder %s18, 3
      %p253 = pnand %p251, %p252
      %p254 = pneg %p253
      // Predicated region
      $region9: #{bert_classifier_forward.1} parent=5 // pred_check
        _
      $region10: #{bert_classifier_forward.1} parent=5 // pred_check_branch
        %256 = sbr.rel (%p253) target = $region12
      $region11: #{bert_classifier_forward.1} parent=5 // pred_region
        %s257 = ssub.s32 %s18, 1
        // Predicated region
        $region13: #{bert_classifier_forward.1} parent=11 // pred_check
          %p258 = pneg %p91
        $region14: #{bert_classifier_forward.1} parent=11 // pred_check_branch
          %260 = sbr.rel (%p258) target = $region16
        $region15: #{bert_classifier_forward.1} parent=11 // pred_region
          _
        $region16: #{bert_classifier_forward.1} parent=11 // pred_fallthru
          _
        // Predicated region
        $region17: #{bert_classifier_forward.1} parent=11 // pred_check
          %p261 = pneg %p112
        $region18: #{bert_classifier_forward.1} parent=11 // pred_check_branch
          %263 = sbr.rel (%p261) target = $region20
        $region19: #{bert_classifier_forward.1} parent=11 // pred_region
          _
        $region20: #{bert_classifier_forward.1} parent=11 // pred_fallthru
          _
        // Predicated region
        $region21: #{bert_classifier_forward.1} parent=11 // pred_check
          %p264 = pneg %p133
        $region22: #{bert_classifier_forward.1} parent=11 // pred_check_branch
          %266 = sbr.rel (%p264) target = $region24
        $region23: #{bert_classifier_forward.1} parent=11 // pred_region
          _
        $region24: #{bert_classifier_forward.1} parent=11 // pred_fallthru
          _
        // Predicated region
        $region25: #{bert_classifier_forward.1} parent=11 // pred_check
          %p267 = pneg %p154
        $region26: #{bert_classifier_forward.1} parent=11 // pred_check_branch
          %269 = sbr.rel (%p267) target = $region28
        $region27: #{bert_classifier_forward.1} parent=11 // pred_region
          _
        $region28: #{bert_classifier_forward.1} parent=11 // pred_fallthru
          _
        // Predicated region
        $region29: #{bert_classifier_forward.1} parent=11 // pred_check
          %p270 = pneg %p175
        $region30: #{bert_classifier_forward.1} parent=11 // pred_check_branch
          %272 = sbr.rel (%p270) target = $region32
        $region31: #{bert_classifier_forward.1} parent=11 // pred_region
          _
        $region32: #{bert_classifier_forward.1} parent=11 // pred_fallthru
          _
        // Predicated region
        $region33: #{bert_classifier_forward.1} parent=11 // pred_check
          %p273 = pneg %p196
        $region34: #{bert_classifier_forward.1} parent=11 // pred_check_branch
          %275 = sbr.rel (%p273) target = $region36
        $region35: #{bert_classifier_forward.1} parent=11 // pred_region
          _
        $region36: #{bert_classifier_forward.1} parent=11 // pred_fallthru
          _
        // Predicated region
        $region37: #{bert_classifier_forward.1} parent=11 // pred_check
          %p276 = pneg %p217
        $region38: #{bert_classifier_forward.1} parent=11 // pred_check_branch
          %278 = sbr.rel (%p276) target = $region40
        $region39: #{bert_classifier_forward.1} parent=11 // pred_region
          _
        $region40: #{bert_classifier_forward.1} parent=11 // pred_fallthru
          _
      $region12: #{bert_classifier_forward.1} parent=5 // pred_fallthru
        _
      %p279 = scmp.lt.s32.totalorder %s18, 2
      // Predicated region
      $region41: #{bert_classifier_forward.1} parent=5 // pred_check
        %p280 = pneg %p279
      $region42: #{bert_classifier_forward.1} parent=5 // pred_check_branch
        %282 = sbr.rel (%p280) target = $region44
      $region43: #{bert_classifier_forward.1} parent=5 // pred_region
        // Predicated region
        $region45: #{bert_classifier_forward.1} parent=43 // pred_check
          %p283 = pneg %p38
        $region46: #{bert_classifier_forward.1} parent=43 // pred_check_branch
          %285 = sbr.rel (%p283) target = $region48
        $region47: #{bert_classifier_forward.1} parent=43 // pred_region
          %p286 = scmp.lt.s32.totalorder %s18, 1
          %s287 = scalar_select %p286, %s18, 1
          %s288 = smul.addr %s287, 8
          %s289 = scalar_lea.vmem %s0, %s288
        $region48: #{bert_classifier_forward.1} parent=43 // pred_fallthru
          _
        // Predicated region
        $region49: #{bert_classifier_forward.1} parent=43 // pred_check
          %p290 = pneg %p64
        $region50: #{bert_classifier_forward.1} parent=43 // pred_check_branch
          %292 = sbr.rel (%p290) target = $region52
        $region51: #{bert_classifier_forward.1} parent=43 // pred_region
          %p293 = scmp.lt.s32.totalorder %s18, 1
          %s294 = scalar_select %p293, %s18, 1
          %s295 = scalar_lea.vmem %s1, %s294
        $region52: #{bert_classifier_forward.1} parent=43 // pred_fallthru
          _
      $region44: #{bert_classifier_forward.1} parent=5 // pred_fallthru
        _
      %p296 = scmp.le.s32.totalorder 1, %s18
      %p297 = scmp.lt.s32.totalorder %s18, 3
      %p298 = pnand %p296, %p297
      %p299 = pneg %p298
      // Predicated region
      $region53: #{bert_classifier_forward.1} parent=5 // pred_check
        _
      $region54: #{bert_classifier_forward.1} parent=5 // pred_check_branch
        %301 = sbr.rel (%p298) target = $region56
      $region55: #{bert_classifier_forward.1} parent=5 // pred_region
        %s302 = ssub.s32 %s18, 1
        %p303 = scmp.lt.s32.totalorder %s23, 1
        %s304 = scalar_select %p303, %s23, 1
        %s305 = smul.addr %s304, 8
        %s306 = scalar_lea.vmem %s0, %s305
        %p307 = pneg %p44
        %p308 = pneg %p41
        %p309 = scmp.lt.s32.totalorder %s23, 1
        %s310 = scalar_select %p309, %s23, 1
        %s311 = scalar_lea.vmem %s1, %s310
        %p312 = pneg %p70
        %p313 = pneg %p67
        %p314 = pneg %p91
        %p315 = pneg %p88
        %p316 = pneg %p112
        %p317 = pneg %p109
        %p318 = pneg %p133
        %p319 = pneg %p130
        %p320 = pneg %p154
        %p321 = pneg %p151
        %p322 = pneg %p175
        %p323 = pneg %p172
        %p324 = pneg %p196
        %p325 = pneg %p193
        %p326 = pneg %p217
        %p327 = pneg %p214
        %p328 = pneg %p243
        %p329 = pneg %p240
        %s330 = sand.u32 %s230, 1
        %s331 = scalar_lea.sflag [#allocation3], %s330
        %s332 = sand.u32 %s230, 1
        %s333 = scalar_lea.vmem [#allocation2], %s332
        %p334 = scmp.lt.s32.totalorder %s23, 1
        %s335 = scalar_select %p334, %s23, 1
        %s336 = smul.addr %s335, 8
        %s337 = scalar_lea.vmem %s0, %s336
        %p338 = scmp.lt.s32.totalorder %s23, 1
        %s339 = scalar_select %p338, %s23, 1
        %s340 = scalar_lea.vmem %s1, %s339
        %v342 = vld [vmem:[%s2] sm:$0xff]
        %v343 = vld [vmem:[%s2 + $0x8] sm:$0xff]
        %v344 = vld [vmem:[%s337] sm:$0xff]
        %vm345 = vcmask 261120
        %v346 = vsel %vm345, %v344, 0.0
        %347 = vadd.xlane.f32.xlu0 %v346
        %v348 = vpop.xlane.xlu0 %347
        %v349 = vrcp.pop 32.0
        %v350 = vmul.f32 %v348, %v349
        %v351 = vsub.f32 %v344, %v350
        %v352 = vmul.f32 %v351, %v351
        %v353 = vsel %vm345, %v352, 0.0
        %354 = vadd.xlane.f32.xlu0 %v353
        %v355 = vpop.xlane.xlu0 %354
        %v356 = vmul.f32 %v355, %v349
        %v357 = vadd.f32 %v356, 1e-12
        %v358 = vrsqrt.pop %v357
        %v359 = vmul.f32 %v351, %v358
        %v360 = vlaneseq
        %v361 = vshrl.u32 %v360, 7
        %v362 = vsub.s32 0, %v361
        %v363 = vrot.slane %v342, %v362
        %v364 = vmul.f32 %v359, %v363
        %v365 = vlaneseq
        %v366 = vshrl.u32 %v365, 7
        %v367 = vsub.s32 1, %v366
        %v368 = vrot.slane %v342, %v367
        %v369 = vadd.f32 %v364, %v368
        %v370 = vpack.c.bf16 %v369, %v369
        %v371 = vld [vmem:[%s3] sm:$0xf]
        %v372 = vld [vmem:[%s3 + $0x4] sm:$0xf]
        %v373 = vld [vmem:[%s3 + $0x8] sm:$0xf]
        %v374 = vld [vmem:[%s3 + $0xc] sm:$0xf]
        %v375 = vld [vmem:[%s3 + $0x10] sm:$0xf]
        %v376 = vld [vmem:[%s3 + $0x14] sm:$0xf]
        %v377 = vld [vmem:[%s3 + $0x18] sm:$0xf]
        %v378 = vld [vmem:[%s3 + $0x1c] sm:$0xf]
        %v379 = vld [vmem:[%s3 + $0x20] sm:$0xf]
        %v380 = vld [vmem:[%s3 + $0x24] sm:$0xf]
        %v381 = vld [vmem:[%s3 + $0x28] sm:$0xf]
        %v382 = vld [vmem:[%s3 + $0x2c] sm:$0xf]
        %v383 = vld [vmem:[%s3 + $0x30] sm:$0xf]
        %v384 = vld [vmem:[%s3 + $0x34] sm:$0xf]
        %v385 = vld [vmem:[%s3 + $0x38] sm:$0xf]
        %v386 = vld [vmem:[%s3 + $0x3c] sm:$0xf]
        %v387 = vld [vmem:[%s4] sm:$0x1]
        %v388 = vld [vmem:[%s4 + $0x1] sm:$0x1]
        %v389 = vld [vmem:[%s4 + $0x2] sm:$0x1]
        %v390 = vld [vmem:[%s4 + $0x3] sm:$0x1]
        %v395 = vlaneseq
        %v396 = vshrl.u32 %v395, 7
        %v397 = vsub.s32 0, %v396
        %v398 = vrot.slane %v387, %v397
        %v399 = vlaneseq
        %v400 = vshrl.u32 %v399, 7
        %v401 = vsub.s32 0, %v400
        %v402 = vrot.slane %v388, %v401
        %v403 = vlaneseq
        %v404 = vshrl.u32 %v403, 7
        %v405 = vsub.s32 0, %v404
        %v406 = vrot.slane %v389, %v405
        %v407 = vlaneseq
        %v408 = vshrl.u32 %v407, 7
        %v409 = vsub.s32 0, %v408
        %v410 = vrot.slane %v390, %v409
        %v419 = vunpack.c.l.b16 %v371
        %v420 = vunpack.c.l.b16 %v372
        %v421 = vunpack.c.l.b16 %v373
        %v422 = vunpack.c.l.b16 %v374
        %v423 = vpack.c.b16 %v420, %v419
        %v424 = vpack.c.b16 %v422, %v421
        %v428 = vsel %vm345, %v370, 0
        %430 = vmatprep.subr.bf16.mxu0 0
        %431 = vmatpush1.bf16.msra.mxu0 %v423
        %432 = vmatprep.subr.bf16.mxu0 0
        %433 = vmatpush1.bf16.msra.mxu0 %v424
        %434 = vmatprep.subr.bf16.mxu0 0
        %435 = vmatpush1.bf16.msra.mxu0 0
        %436 = vmatprep.subr.bf16.mxu0 0
        %437 = vmatpush1.bf16.msra.mxu0 0
        %438 = vmatprep.subr.bf16.mxu0 0
        %439 = vmatpush1.bf16.msra.mxu0 0
        %440 = vmatprep.subr.bf16.mxu0 0
        %441 = vmatpush1.bf16.msra.mxu0 0
        %442 = vmatprep.subr.bf16.mxu0 0
        %443 = vmatpush1.bf16.msra.mxu0 0
        %444 = vmatprep.subr.bf16.mxu0 0
        %445 = vmatpush1.bf16.msra.mxu0 0
        %446 = vmatprep.subr.bf16.mxu0 0
        %447 = vmatpush1.bf16.msra.mxu0 0
        %448 = vmatprep.subr.bf16.mxu0 0
        %449 = vmatpush1.bf16.msra.mxu0 0
        %450 = vmatprep.subr.bf16.mxu0 0
        %451 = vmatpush1.bf16.msra.mxu0 0
        %452 = vmatprep.subr.bf16.mxu0 0
        %453 = vmatpush1.bf16.msra.mxu0 0
        %454 = vmatprep.subr.bf16.mxu0 0
        %455 = vmatpush1.bf16.msra.mxu0 0
        %456 = vmatprep.subr.bf16.mxu0 0
        %457 = vmatpush1.bf16.msra.mxu0 0
        %458 = vmatprep.subr.bf16.mxu0 0
        %459 = vmatpush1.bf16.msra.mxu0 0
        %460 = vmatprep.subr.bf16.mxu0 0
        %461 = vmatpush1.bf16.msra.mxu0 0
        %462 = vmatprep.mubr.bf16.mxu0 0
        %463 = vmatmul.mubr.bf16.gmra.mrb[0].mxu0 %v428
        %v464 = vpop.f32.mrb[0].mxu0
        %v465 = vadd.f32 %v398, %v464
        %v466 = vpop.f32.mrb[0].mxu0
        %v467 = vpop.f32.mrb[0].mxu0
        %v468 = vpop.f32.mrb[0].mxu0
        %469 = vdwg.mxu0
        %v474 = vunpack.c.l.b16 %v375
        %v475 = vunpack.c.l.b16 %v376
        %v476 = vunpack.c.l.b16 %v377
        %v477 = vunpack.c.l.b16 %v378
        %v478 = vpack.c.b16 %v475, %v474
        %v479 = vpack.c.b16 %v477, %v476
        %482 = vmatprep.subr.bf16.mxu0 0
        %483 = vmatpush1.bf16.msra.mxu0 %v478
        %484 = vmatprep.subr.bf16.mxu0 0
        %485 = vmatpush1.bf16.msra.mxu0 %v479
        %486 = vmatprep.subr.bf16.mxu0 0
        %487 = vmatpush1.bf16.msra.mxu0 0
        %488 = vmatprep.subr.bf16.mxu0 0
        %489 = vmatpush1.bf16.msra.mxu0 0
        %490 = vmatprep.subr.bf16.mxu0 0
        %491 = vmatpush1.bf16.msra.mxu0 0
        %492 = vmatprep.subr.bf16.mxu0 0
        %493 = vmatpush1.bf16.msra.mxu0 0
        %494 = vmatprep.subr.bf16.mxu0 0
        %495 = vmatpush1.bf16.msra.mxu0 0
        %496 = vmatprep.subr.bf16.mxu0 0
        %497 = vmatpush1.bf16.msra.mxu0 0
        %498 = vmatprep.subr.bf16.mxu0 0
        %499 = vmatpush1.bf16.msra.mxu0 0
        %500 = vmatprep.subr.bf16.mxu0 0
        %501 = vmatpush1.bf16.msra.mxu0 0
        %502 = vmatprep.subr.bf16.mxu0 0
        %503 = vmatpush1.bf16.msra.mxu0 0
        %504 = vmatprep.subr.bf16.mxu0 0
        %505 = vmatpush1.bf16.msra.mxu0 0
        %506 = vmatprep.subr.bf16.mxu0 0
        %507 = vmatpush1.bf16.msra.mxu0 0
        %508 = vmatprep.subr.bf16.mxu0 0
        %509 = vmatpush1.bf16.msra.mxu0 0
        %510 = vmatprep.subr.bf16.mxu0 0
        %511 = vmatpush1.bf16.msra.mxu0 0
        %512 = vmatprep.subr.bf16.mxu0 0
        %513 = vmatpush1.bf16.msra.mxu0 0
        %514 = vmatprep.mubr.bf16.mxu0 0
        %515 = vmatmul.mubr.bf16.gmra.mrb[0].mxu0 %v428
        %v516 = vpop.f32.mrb[0].mxu0
        %v517 = vadd.f32 %v402, %v516
        %v518 = vpop.f32.mrb[0].mxu0
        %v519 = vpop.f32.mrb[0].mxu0
        %v520 = vpop.f32.mrb[0].mxu0
        %521 = vdwg.mxu0
        %v526 = vunpack.c.l.b16 %v379
        %v527 = vunpack.c.l.b16 %v380
        %v528 = vunpack.c.l.b16 %v381
        %v529 = vunpack.c.l.b16 %v382
        %v530 = vpack.c.b16 %v527, %v526
        %v531 = vpack.c.b16 %v529, %v528
        %534 = vmatprep.subr.bf16.mxu0 0
        %535 = vmatpush1.bf16.msra.mxu0 %v530
        %536 = vmatprep.subr.bf16.mxu0 0
        %537 = vmatpush1.bf16.msra.mxu0 %v531
        %538 = vmatprep.subr.bf16.mxu0 0
        %539 = vmatpush1.bf16.msra.mxu0 0
        %540 = vmatprep.subr.bf16.mxu0 0
        %541 = vmatpush1.bf16.msra.mxu0 0
        %542 = vmatprep.subr.bf16.mxu0 0
        %543 = vmatpush1.bf16.msra.mxu0 0
        %544 = vmatprep.subr.bf16.mxu0 0
        %545 = vmatpush1.bf16.msra.mxu0 0
        %546 = vmatprep.subr.bf16.mxu0 0
        %547 = vmatpush1.bf16.msra.mxu0 0
        %548 = vmatprep.subr.bf16.mxu0 0
        %549 = vmatpush1.bf16.msra.mxu0 0
        %550 = vmatprep.subr.bf16.mxu0 0
        %551 = vmatpush1.bf16.msra.mxu0 0
        %552 = vmatprep.subr.bf16.mxu0 0
        %553 = vmatpush1.bf16.msra.mxu0 0
        %554 = vmatprep.subr.bf16.mxu0 0
        %555 = vmatpush1.bf16.msra.mxu0 0
        %556 = vmatprep.subr.bf16.mxu0 0
        %557 = vmatpush1.bf16.msra.mxu0 0
        %558 = vmatprep.subr.bf16.mxu0 0
        %559 = vmatpush1.bf16.msra.mxu0 0
        %560 = vmatprep.subr.bf16.mxu0 0
        %561 = vmatpush1.bf16.msra.mxu0 0
        %562 = vmatprep.subr.bf16.mxu0 0
        %563 = vmatpush1.bf16.msra.mxu0 0
        %564 = vmatprep.subr.bf16.mxu0 0
        %565 = vmatpush1.bf16.msra.mxu0 0
        %566 = vmatprep.mubr.bf16.mxu0 0
        %567 = vmatmul.mubr.bf16.gmra.mrb[0].mxu0 %v428
        %v568 = vpop.f32.mrb[0].mxu0
        %v569 = vadd.f32 %v406, %v568
        %v570 = vpop.f32.mrb[0].mxu0
        %v571 = vpop.f32.mrb[0].mxu0
        %v572 = vpop.f32.mrb[0].mxu0
        %573 = vdwg.mxu0
        %v578 = vunpack.c.l.b16 %v383
        %v579 = vunpack.c.l.b16 %v384
        %v580 = vunpack.c.l.b16 %v385
        %v581 = vunpack.c.l.b16 %v386
        %v582 = vpack.c.b16 %v579, %v578
        %v583 = vpack.c.b16 %v581, %v580
        %586 = vmatprep.subr.bf16.mxu0 0
        %587 = vmatpush1.bf16.msra.mxu0 %v582
        %588 = vmatprep.subr.bf16.mxu0 0
        %589 = vmatpush1.bf16.msra.mxu0 %v583
        %590 = vmatprep.subr.bf16.mxu0 0
        %591 = vmatpush1.bf16.msra.mxu0 0
        %592 = vmatprep.subr.bf16.mxu0 0
        %593 = vmatpush1.bf16.msra.mxu0 0
        %594 = vmatprep.subr.bf16.mxu0 0
        %595 = vmatpush1.bf16.msra.mxu0 0
        %596 = vmatprep.subr.bf16.mxu0 0
        %597 = vmatpush1.bf16.msra.mxu0 0
        %598 = vmatprep.subr.bf16.mxu0 0
        %599 = vmatpush1.bf16.msra.mxu0 0
        %600 = vmatprep.subr.bf16.mxu0 0
        %601 = vmatpush1.bf16.msra.mxu0 0
        %602 = vmatprep.subr.bf16.mxu0 0
        %603 = vmatpush1.bf16.msra.mxu0 0
        %604 = vmatprep.subr.bf16.mxu0 0
        %605 = vmatpush1.bf16.msra.mxu0 0
        %606 = vmatprep.subr.bf16.mxu0 0
        %607 = vmatpush1.bf16.msra.mxu0 0
        %608 = vmatprep.subr.bf16.mxu0 0
        %609 = vmatpush1.bf16.msra.mxu0 0
        %610 = vmatprep.subr.bf16.mxu0 0
        %611 = vmatpush1.bf16.msra.mxu0 0
        %612 = vmatprep.subr.bf16.mxu0 0
        %613 = vmatpush1.bf16.msra.mxu0 0
        %614 = vmatprep.subr.bf16.mxu0 0
        %615 = vmatpush1.bf16.msra.mxu0 0
        %616 = vmatprep.subr.bf16.mxu0 0
        %617 = vmatpush1.bf16.msra.mxu0 0
        %618 = vmatprep.mubr.bf16.mxu0 0
        %619 = vmatmul.mubr.bf16.gmra.mrb[0].mxu0 %v428
        %v620 = vpop.f32.mrb[0].mxu0
        %v621 = vadd.f32 %v410, %v620
        %v622 = vpop.f32.mrb[0].mxu0
        %v623 = vpop.f32.mrb[0].mxu0
        %v624 = vpop.f32.mrb[0].mxu0
        %625 = vdwg.mxu0
        %v626 = vpack.c.bf16 %v465, %v465
        %v627 = vpack.c.bf16 %v517, %v517
        %v628 = vpack.c.bf16 %v569, %v569
        %v629 = vpack.c.bf16 %v621, %v621
        %v630 = vld [vmem:[%s340] sm:$0x1]
        %vm631 = vcmp.gt.f32.partialorder %v630, 0.0
        %v632 = vsel %vm631, 0.0, -1e+09
        %v634 = vlaneseq
        %v635 = vshrl.u32 %v634, 7
        %v636 = vsub.s32 0, %v635
        %v637 = vrot.slane %v632, %v636
        %640 = vrot.lane.b32.xlu0 %v626, 120
        %v641 = vpop.permute.xlu0 %640
        %vm642 = vcmask 64512
        %v644 = vsel %vm642, %v626, 0
        %v647 = vsel %vm642, %v641, 0
        %649 = vmatprep.subr.bf16.mxu0 0
        %650 = vmatpush1.bf16.xpose.msra.mxu0 %v647
        %651 = vmatprep.subr.bf16.mxu0 0
        %652 = vmatpush1.bf16.xpose.msra.mxu0 0
        %653 = vmatprep.subr.bf16.mxu0 0
        %654 = vmatpush1.bf16.xpose.msra.mxu0 0
        %655 = vmatprep.subr.bf16.mxu0 0
        %656 = vmatpush1.bf16.xpose.msra.mxu0 0
        %657 = vmatprep.subr.bf16.mxu0 0
        %658 = vmatpush1.bf16.xpose.msra.mxu0 0
        %659 = vmatprep.subr.bf16.mxu0 0
        %660 = vmatpush1.bf16.xpose.msra.mxu0 0
        %661 = vmatprep.subr.bf16.mxu0 0
        %662 = vmatpush1.bf16.xpose.msra.mxu0 0
        %663 = vmatprep.subr.bf16.mxu0 0
        %664 = vmatpush1.bf16.xpose.msra.mxu0 0
        %665 = vmatprep.subr.bf16.mxu0 0
        %666 = vmatpush1.bf16.xpose.msra.mxu0 0
        %667 = vmatprep.subr.bf16.mxu0 0
        %668 = vmatpush1.bf16.xpose.msra.mxu0 0
        %669 = vmatprep.subr.bf16.mxu0 0
        %670 = vmatpush1.bf16.xpose.msra.mxu0 0
        %671 = vmatprep.subr.bf16.mxu0 0
        %672 = vmatpush1.bf16.xpose.msra.mxu0 0
        %673 = vmatprep.subr.bf16.mxu0 0
        %674 = vmatpush1.bf16.xpose.msra.mxu0 0
        %675 = vmatprep.subr.bf16.mxu0 0
        %676 = vmatpush1.bf16.xpose.msra.mxu0 0
        %677 = vmatprep.subr.bf16.mxu0 0
        %678 = vmatpush1.bf16.xpose.msra.mxu0 0
        %679 = vmatprep.subr.bf16.mxu0 0
        %680 = vmatpush1.bf16.xpose.msra.mxu0 0
        %681 = vmatprep.mubr.bf16.mxu0 0
        %682 = vmatmul.mubr.bf16.gmra.mrb[0].mxu0 %v644
        %v683 = vpop.f32.mrb[0].mxu0
        %v684 = vadd.f32 %v637, %v683
        %v685 = vpop.f32.mrb[0].mxu0
        %v686 = vpop.f32.mrb[0].mxu0
        %v687 = vpop.f32.mrb[0].mxu0
        %688 = vdwg.mxu0
        %690 = vrot.lane.b32.xlu0 %v627, 120
        %v691 = vpop.permute.xlu0 %690
        %v693 = vsel %vm642, %v627, 0
        %v696 = vsel %vm642, %v691, 0
        %698 = vmatprep.subr.bf16.mxu0 0
        %699 = vmatpush1.bf16.xpose.msra.mxu0 %v696
        %700 = vmatprep.subr.bf16.mxu0 0
        %701 = vmatpush1.bf16.xpose.msra.mxu0 0
        %702 = vmatprep.subr.bf16.mxu0 0
        %703 = vmatpush1.bf16.xpose.msra.mxu0 0
        %704 = vmatprep.subr.bf16.mxu0 0
        %705 = vmatpush1.bf16.xpose.msra.mxu0 0
        %706 = vmatprep.subr.bf16.mxu0 0
        %707 = vmatpush1.bf16.xpose.msra.mxu0 0
        %708 = vmatprep.subr.bf16.mxu0 0
        %709 = vmatpush1.bf16.xpose.msra.mxu0 0
        %710 = vmatprep.subr.bf16.mxu0 0
        %711 = vmatpush1.bf16.xpose.msra.mxu0 0
        %712 = vmatprep.subr.bf16.mxu0 0
        %713 = vmatpush1.bf16.xpose.msra.mxu0 0
        %714 = vmatprep.subr.bf16.mxu0 0
        %715 = vmatpush1.bf16.xpose.msra.mxu0 0
        %716 = vmatprep.subr.bf16.mxu0 0
        %717 = vmatpush1.bf16.xpose.msra.mxu0 0
        %718 = vmatprep.subr.bf16.mxu0 0
        %719 = vmatpush1.bf16.xpose.msra.mxu0 0
        %720 = vmatprep.subr.bf16.mxu0 0
        %721 = vmatpush1.bf16.xpose.msra.mxu0 0
        %722 = vmatprep.subr.bf16.mxu0 0
        %723 = vmatpush1.bf16.xpose.msra.mxu0 0
        %724 = vmatprep.subr.bf16.mxu0 0
        %725 = vmatpush1.bf16.xpose.msra.mxu0 0
        %726 = vmatprep.subr.bf16.mxu0 0
        %727 = vmatpush1.bf16.xpose.msra.mxu0 0
        %728 = vmatprep.subr.bf16.mxu0 0
        %729 = vmatpush1.bf16.xpose.msra.mxu0 0
        %730 = vmatprep.mubr.bf16.mxu0 0
        %731 = vmatmul.mubr.bf16.gmra.mrb[0].mxu0 %v693
        %v732 = vpop.f32.mrb[0].mxu0
        %v733 = vadd.f32 %v637, %v732
        %v734 = vpop.f32.mrb[0].mxu0
        %v735 = vpop.f32.mrb[0].mxu0
        %v736 = vpop.f32.mrb[0].mxu0
        %737 = vdwg.mxu0
        %739 = vrot.lane.b32.xlu0 %v628, 120
        %v740 = vpop.permute.xlu0 %739
        %v742 = vsel %vm642, %v628, 0
        %v745 = vsel %vm642, %v740, 0
        %747 = vmatprep.subr.bf16.mxu0 0
        %748 = vmatpush1.bf16.xpose.msra.mxu0 %v745
        %749 = vmatprep.subr.bf16.mxu0 0
        %750 = vmatpush1.bf16.xpose.msra.mxu0 0
        %751 = vmatprep.subr.bf16.mxu0 0
        %752 = vmatpush1.bf16.xpose.msra.mxu0 0
        %753 = vmatprep.subr.bf16.mxu0 0
        %754 = vmatpush1.bf16.xpose.msra.mxu0 0
        %755 = vmatprep.subr.bf16.mxu0 0
        %756 = vmatpush1.bf16.xpose.msra.mxu0 0
        %757 = vmatprep.subr.bf16.mxu0 0
        %758 = vmatpush1.bf16.xpose.msra.mxu0 0
        %759 = vmatprep.subr.bf16.mxu0 0
        %760 = vmatpush1.bf16.xpose.msra.mxu0 0
        %761 = vmatprep.subr.bf16.mxu0 0
        %762 = vmatpush1.bf16.xpose.msra.mxu0 0
        %763 = vmatprep.subr.bf16.mxu0 0
        %764 = vmatpush1.bf16.xpose.msra.mxu0 0
        %765 = vmatprep.subr.bf16.mxu0 0
        %766 = vmatpush1.bf16.xpose.msra.mxu0 0
        %767 = vmatprep.subr.bf16.mxu0 0
        %768 = vmatpush1.bf16.xpose.msra.mxu0 0
        %769 = vmatprep.subr.bf16.mxu0 0
        %770 = vmatpush1.bf16.xpose.msra.mxu0 0
        %771 = vmatprep.subr.bf16.mxu0 0
        %772 = vmatpush1.bf16.xpose.msra.mxu0 0
        %773 = vmatprep.subr.bf16.mxu0 0
        %774 = vmatpush1.bf16.xpose.msra.mxu0 0
        %775 = vmatprep.subr.bf16.mxu0 0
        %776 = vmatpush1.bf16.xpose.msra.mxu0 0
        %777 = vmatprep.subr.bf16.mxu0 0
        %778 = vmatpush1.bf16.xpose.msra.mxu0 0
        %779 = vmatprep.mubr.bf16.mxu0 0
        %780 = vmatmul.mubr.bf16.gmra.mrb[0].mxu0 %v742
        %v781 = vpop.f32.mrb[0].mxu0
        %v782 = vadd.f32 %v637, %v781
        %v783 = vpop.f32.mrb[0].mxu0
        %v784 = vpop.f32.mrb[0].mxu0
        %v785 = vpop.f32.mrb[0].mxu0
        %786 = vdwg.mxu0
        %788 = vrot.lane.b32.xlu0 %v629, 120
        %v789 = vpop.permute.xlu0 %788
        %v791 = vsel %vm642, %v629, 0
        %v794 = vsel %vm642, %v789, 0
        %796 = vmatprep.subr.bf16.mxu0 0
        %797 = vmatpush1.bf16.xpose.msra.mxu0 %v794
        %798 = vmatprep.subr.bf16.mxu0 0
        %799 = vmatpush1.bf16.xpose.msra.mxu0 0
        %800 = vmatprep.subr.bf16.mxu0 0
        %801 = vmatpush1.bf16.xpose.msra.mxu0 0
        %802 = vmatprep.subr.bf16.mxu0 0
        %803 = vmatpush1.bf16.xpose.msra.mxu0 0
        %804 = vmatprep.subr.bf16.mxu0 0
        %805 = vmatpush1.bf16.xpose.msra.mxu0 0
        %806 = vmatprep.subr.bf16.mxu0 0
        %807 = vmatpush1.bf16.xpose.msra.mxu0 0
        %808 = vmatprep.subr.bf16.mxu0 0
        %809 = vmatpush1.bf16.xpose.msra.mxu0 0
        %810 = vmatprep.subr.bf16.mxu0 0
        %811 = vmatpush1.bf16.xpose.msra.mxu0 0
        %812 = vmatprep.subr.bf16.mxu0 0
        %813 = vmatpush1.bf16.xpose.msra.mxu0 0
        %814 = vmatprep.subr.bf16.mxu0 0
        %815 = vmatpush1.bf16.xpose.msra.mxu0 0
        %816 = vmatprep.subr.bf16.mxu0 0
        %817 = vmatpush1.bf16.xpose.msra.mxu0 0
        %818 = vmatprep.subr.bf16.mxu0 0
        %819 = vmatpush1.bf16.xpose.msra.mxu0 0
        %820 = vmatprep.subr.bf16.mxu0 0
        %821 = vmatpush1.bf16.xpose.msra.mxu0 0
        %822 = vmatprep.subr.bf16.mxu0 0
        %823 = vmatpush1.bf16.xpose.msra.mxu0 0
        %824 = vmatprep.subr.bf16.mxu0 0
        %825 = vmatpush1.bf16.xpose.msra.mxu0 0
        %826 = vmatprep.subr.bf16.mxu0 0
        %827 = vmatpush1.bf16.xpose.msra.mxu0 0
        %828 = vmatprep.mubr.bf16.mxu0 0
        %829 = vmatmul.mubr.bf16.gmra.mrb[0].mxu0 %v791
        %v830 = vpop.f32.mrb[0].mxu0
        %v831 = vadd.f32 %v637, %v830
        %v832 = vpop.f32.mrb[0].mxu0
        %v833 = vpop.f32.mrb[0].mxu0
        %v834 = vpop.f32.mrb[0].mxu0
        %835 = vdwg.mxu0
        %v836 = vsel %vm642, %v684, -inf
        %837 = vmax.xlane.f32.xlu0 %v836
        %v838 = vpop.xlane.xlu0 %837
        %v839 = vsel %vm642, %v733, -inf
        %840 = vmax.xlane.f32.xlu0 %v839
        %v841 = vpop.xlane.xlu0 %840
        %v842 = vsel %vm642, %v782, -inf
        %843 = vmax.xlane.f32.xlu0 %v842
        %v844 = vpop.xlane.xlu0 %843
        %v845 = vsel %vm642, %v831, -inf
        %846 = vmax.xlane.f32.xlu0 %v845
        %v847 = vpop.xlane.xlu0 %846
        %v848 = vsub.f32 %v684, %v838
        %v849 = vsub.f32 %v733, %v841
        %v850 = vsub.f32 %v782, %v844
        %v851 = vsub.f32 %v831, %v847
        %v852 = vmul.f32 %v848, 1.442695
        %v853 = vpow.pop %v852
        %v854 = vmul.f32 %v849, 1.442695
        %v855 = vpow.pop %v854
        %v856 = vmul.f32 %v850, 1.442695
        %v857 = vpow.pop %v856
        %v858 = vmul.f32 %v851, 1.442695
        %v859 = vpow.pop %v858
        %v860 = vsel %vm642, %v853, 0.0
        %861 = vadd.xlane.f32.xlu0 %v860
        %v862 = vpop.xlane.xlu0 %861
        %v863 = vsel %vm642, %v855, 0.0
        %864 = vadd.xlane.f32.xlu0 %v863
        %v865 = vpop.xlane.xlu0 %864
        %v866 = vsel %vm642, %v857, 0.0
        %867 = vadd.xlane.f32.xlu0 %v866
        %v868 = vpop.xlane.xlu0 %867
        %v869 = vsel %vm642, %v859, 0.0
        %870 = vadd.xlane.f32.xlu0 %v869
        %v871 = vpop.xlane.xlu0 %870
        %v872 = vrcp.pop %v862
        %v873 = vrcp.pop %v865
        %v874 = vrcp.pop %v868
        %v875 = vrcp.pop %v871
        %v876 = vmul.f32 %v853, %v872
        %v877 = vmul.f32 %v855, %v873
        %v878 = vmul.f32 %v857, %v874
        %v879 = vmul.f32 %v859, %v875
        %v880 = vpack.c.bf16 %v876, %v876
        %v881 = vpack.c.bf16 %v877, %v877
        %v882 = vpack.c.bf16 %v878, %v878
        %v883 = vpack.c.bf16 %v879, %v879
        %884 = vrot.lane.b32.xlu0 %v626, 112
        %v885 = vpop.permute.xlu0 %884
        %v887 = vsel %vm642, %v880, 0
        %vm889 = vcmask 1043456
        %v891 = vsel %vm889, %v885, 0
        %893 = vmatprep.subr.bf16.mxu0 0
        %894 = vmatpush1.bf16.msra.mxu0 %v891
        %895 = vmatprep.subr.bf16.mxu0 0
        %896 = vmatpush1.bf16.msra.mxu0 0
        %897 = vmatprep.subr.bf16.mxu0 0
        %898 = vmatpush1.bf16.msra.mxu0 0
        %899 = vmatprep.subr.bf16.mxu0 0
        %900 = vmatpush1.bf16.msra.mxu0 0
        %901 = vmatprep.subr.bf16.mxu0 0
        %902 = vmatpush1.bf16.msra.mxu0 0
        %903 = vmatprep.subr.bf16.mxu0 0
        %904 = vmatpush1.bf16.msra.mxu0 0
        %905 = vmatprep.subr.bf16.mxu0 0
        %906 = vmatpush1.bf16.msra.mxu0 0
        %907 = vmatprep.subr.bf16.mxu0 0
        %908 = vmatpush1.bf16.msra.mxu0 0
        %909 = vmatprep.subr.bf16.mxu0 0
        %910 = vmatpush1.bf16.msra.mxu0 0
        %911 = vmatprep.subr.bf16.mxu0 0
        %912 = vmatpush1.bf16.msra.mxu0 0
        %913 = vmatprep.subr.bf16.mxu0 0
        %914 = vmatpush1.bf16.msra.mxu0 0
        %915 = vmatprep.subr.bf16.mxu0 0
        %916 = vmatpush1.bf16.msra.mxu0 0
        %917 = vmatprep.subr.bf16.mxu0 0
        %918 = vmatpush1.bf16.msra.mxu0 0
        %919 = vmatprep.subr.bf16.mxu0 0
        %920 = vmatpush1.bf16.msra.mxu0 0
        %921 = vmatprep.subr.bf16.mxu0 0
        %922 = vmatpush1.bf16.msra.mxu0 0
        %923 = vmatprep.subr.bf16.mxu0 0
        %924 = vmatpush1.bf16.msra.mxu0 0
        %925 = vmatprep.mubr.bf16.mxu0 0
        %926 = vmatmul.mubr.bf16.gmra.mrb[0].mxu0 %v887
        %v927 = vpop.f32.mrb[0].mxu0
        %v928 = vadd.f32 0.0, %v927
        %v929 = vpop.f32.mrb[0].mxu0
        %v930 = vpop.f32.mrb[0].mxu0
        %v931 = vpop.f32.mrb[0].mxu0
        %932 = vdwg.mxu0
        %933 = vrot.lane.b32.xlu0 %v627, 112
        %v934 = vpop.permute.xlu0 %933
        %v936 = vsel %vm642, %v881, 0
        %v939 = vsel %vm889, %v934, 0
        %941 = vmatprep.subr.bf16.mxu0 0
        %942 = vmatpush1.bf16.msra.mxu0 %v939
        %943 = vmatprep.subr.bf16.mxu0 0
        %944 = vmatpush1.bf16.msra.mxu0 0
        %945 = vmatprep.subr.bf16.mxu0 0
        %946 = vmatpush1.bf16.msra.mxu0 0
        %947 = vmatprep.subr.bf16.mxu0 0
        %948 = vmatpush1.bf16.msra.mxu0 0
        %949 = vmatprep.subr.bf16.mxu0 0
        %950 = vmatpush1.bf16.msra.mxu0 0
        %951 = vmatprep.subr.bf16.mxu0 0
        %952 = vmatpush1.bf16.msra.mxu0 0
        %953 = vmatprep.subr.bf16.mxu0 0
        %954 = vmatpush1.bf16.msra.mxu0 0
        %955 = vmatprep.subr.bf16.mxu0 0
        %956 = vmatpush1.bf16.msra.mxu0 0
        %957 = vmatprep.subr.bf16.mxu0 0
        %958 = vmatpush1.bf16.msra.mxu0 0
        %959 = vmatprep.subr.bf16.mxu0 0
        %960 = vmatpush1.bf16.msra.mxu0 0
        %961 = vmatprep.subr.bf16.mxu0 0
        %962 = vmatpush1.bf16.msra.mxu0 0
        %963 = vmatprep.subr.bf16.mxu0 0
        %964 = vmatpush1.bf16.msra.mxu0 0
        %965 = vmatprep.subr.bf16.mxu0 0
        %966 = vmatpush1.bf16.msra.mxu0 0
        %967 = vmatprep.subr.bf16.mxu0 0
        %968 = vmatpush1.bf16.msra.mxu0 0
        %969 = vmatprep.subr.bf16.mxu0 0
        %970 = vmatpush1.bf16.msra.mxu0 0
        %971 = vmatprep.subr.bf16.mxu0 0
        %972 = vmatpush1.bf16.msra.mxu0 0
        %973 = vmatprep.mubr.bf16.mxu0 0
        %974 = vmatmul.mubr.bf16.gmra.mrb[0].mxu0 %v936
        %v975 = vpop.f32.mrb[0].mxu0
        %v976 = vadd.f32 0.0, %v975
        %v977 = vpop.f32.mrb[0].mxu0
        %v978 = vpop.f32.mrb[0].mxu0
        %v979 = vpop.f32.mrb[0].mxu0
        %980 = vdwg.mxu0
        %981 = vrot.lane.b32.xlu0 %v628, 112
        %v982 = vpop.permute.xlu0 %981
        %v984 = vsel %vm642, %v882, 0
        %v987 = vsel %vm889, %v982, 0
        %989 = vmatprep.subr.bf16.mxu0 0
        %990 = vmatpush1.bf16.msra.mxu0 %v987
        %991 = vmatprep.subr.bf16.mxu0 0
        %992 = vmatpush1.bf16.msra.mxu0 0
        %993 = vmatprep.subr.bf16.mxu0 0
        %994 = vmatpush1.bf16.msra.mxu0 0
        %995 = vmatprep.subr.bf16.mxu0 0
        %996 = vmatpush1.bf16.msra.mxu0 0
        %997 = vmatprep.subr.bf16.mxu0 0
        %998 = vmatpush1.bf16.msra.mxu0 0
        %999 = vmatprep.subr.bf16.mxu0 0
        %1000 = vmatpush1.bf16.msra.mxu0 0
        %1001 = vmatprep.subr.bf16.mxu0 0
        %1002 = vmatpush1.bf16.msra.mxu0 0
        %1003 = vmatprep.subr.bf16.mxu0 0
        %1004 = vmatpush1.bf16.msra.mxu0 0
        %1005 = vmatprep.subr.bf16.mxu0 0
        %1006 = vmatpush1.bf16.msra.mxu0 0
        %1007 = vmatprep.subr.bf16.mxu0 0
        %1008 = vmatpush1.bf16.msra.mxu0 0
        %1009 = vmatprep.subr.bf16.mxu0 0
        %1010 = vmatpush1.bf16.msra.mxu0 0
        %1011 = vmatprep.subr.bf16.mxu0 0
        %1012 = vmatpush1.bf16.msra.mxu0 0
        %1013 = vmatprep.subr.bf16.mxu0 0
        %1014 = vmatpush1.bf16.msra.mxu0 0
        %1015 = vmatprep.subr.bf16.mxu0 0
        %1016 = vmatpush1.bf16.msra.mxu0 0
        %1017 = vmatprep.subr.bf16.mxu0 0
        %1018 = vmatpush1.bf16.msra.mxu0 0
        %1019 = vmatprep.subr.bf16.mxu0 0
        %1020 = vmatpush1.bf16.msra.mxu0 0
        %1021 = vmatprep.mubr.bf16.mxu0 0
        %1022 = vmatmul.mubr.bf16.gmra.mrb[0].mxu0 %v984
        %v1023 = vpop.f32.mrb[0].mxu0
        %v1024 = vadd.f32 0.0, %v1023
        %v1025 = vpop.f32.mrb[0].mxu0
        %v1026 = vpop.f32.mrb[0].mxu0
        %v1027 = vpop.f32.mrb[0].mxu0
        %1028 = vdwg.mxu0
        %1029 = vrot.lane.b32.xlu0 %v629, 112
        %v1030 = vpop.permute.xlu0 %1029
        %v1032 = vsel %vm642, %v883, 0
        %v1035 = vsel %vm889, %v1030, 0
        %1037 = vmatprep.subr.bf16.mxu0 0
        %1038 = vmatpush1.bf16.msra.mxu0 %v1035
        %1039 = vmatprep.subr.bf16.mxu0 0
        %1040 = vmatpush1.bf16.msra.mxu0 0
        %1041 = vmatprep.subr.bf16.mxu0 0
        %1042 = vmatpush1.bf16.msra.mxu0 0
        %1043 = vmatprep.subr.bf16.mxu0 0
        %1044 = vmatpush1.bf16.msra.mxu0 0
        %1045 = vmatprep.subr.bf16.mxu0 0
        %1046 = vmatpush1.bf16.msra.mxu0 0
        %1047 = vmatprep.subr.bf16.mxu0 0
        %1048 = vmatpush1.bf16.msra.mxu0 0
        %1049 = vmatprep.subr.bf16.mxu0 0
        %1050 = vmatpush1.bf16.msra.mxu0 0
        %1051 = vmatprep.subr.bf16.mxu0 0
        %1052 = vmatpush1.bf16.msra.mxu0 0
        %1053 = vmatprep.subr.bf16.mxu0 0
        %1054 = vmatpush1.bf16.msra.mxu0 0
        %1055 = vmatprep.subr.bf16.mxu0 0
        %1056 = vmatpush1.bf16.msra.mxu0 0
        %1057 = vmatprep.subr.bf16.mxu0 0
        %1058 = vmatpush1.bf16.msra.mxu0 0
        %1059 = vmatprep.subr.bf16.mxu0 0
        %1060 = vmatpush1.bf16.msra.mxu0 0
        %1061 = vmatprep.subr.bf16.mxu0 0
        %1062 = vmatpush1.bf16.msra.mxu0 0
        %1063 = vmatprep.subr.bf16.mxu0 0
        %1064 = vmatpush1.bf16.msra.mxu0 0
        %1065 = vmatprep.subr.bf16.mxu0 0
        %1066 = vmatpush1.bf16.msra.mxu0 0
        %1067 = vmatprep.subr.bf16.mxu0 0
        %1068 = vmatpush1.bf16.msra.mxu0 0
        %1069 = vmatprep.mubr.bf16.mxu0 0
        %1070 = vmatmul.mubr.bf16.gmra.mrb[0].mxu0 %v1032
        %v1071 = vpop.f32.mrb[0].mxu0
        %v1072 = vadd.f32 0.0, %v1071
        %v1073 = vpop.f32.mrb[0].mxu0
        %v1074 = vpop.f32.mrb[0].mxu0
        %v1075 = vpop.f32.mrb[0].mxu0
        %1076 = vdwg.mxu0
        %v1077 = vpack.c.bf16 %v928, %v928
        %v1078 = vpack.c.bf16 %v976, %v976
        %v1079 = vpack.c.bf16 %v1024, %v1024
        %v1080 = vpack.c.bf16 %v1072, %v1072
        %v1081 = vld [vmem:[%s5] sm:$0xf]
        %v1082 = vld [vmem:[%s5 + $0x4] sm:$0xf]
        %v1083 = vld [vmem:[%s5 + $0x8] sm:$0xf]
        %v1084 = vld [vmem:[%s5 + $0xc] sm:$0xf]
        %v1086 = vsel %vm642, %v1077, 0
        %v1089 = vsel %vm889, %v1081, 0
        %1091 = vmatprep.subr.bf16.mxu0 0
        %1092 = vmatpush1.bf16.msra.mxu0 %v1089
        %1093 = vmatprep.subr.bf16.mxu0 0
        %1094 = vmatpush1.bf16.msra.mxu0 0
        %1095 = vmatprep.subr.bf16.mxu0 0
        %1096 = vmatpush1.bf16.msra.mxu0 0
        %1097 = vmatprep.subr.bf16.mxu0 0
        %1098 = vmatpush1.bf16.msra.mxu0 0
        %1099 = vmatprep.subr.bf16.mxu0 0
        %1100 = vmatpush1.bf16.msra.mxu0 0
        %1101 = vmatprep.subr.bf16.mxu0 0
        %1102 = vmatpush1.bf16.msra.mxu0 0
        %1103 = vmatprep.subr.bf16.mxu0 0
        %1104 = vmatpush1.bf16.msra.mxu0 0
        %1105 = vmatprep.subr.bf16.mxu0 0
        %1106 = vmatpush1.bf16.msra.mxu0 0
        %1107 = vmatprep.subr.bf16.mxu0 0
        %1108 = vmatpush1.bf16.msra.mxu0 0
        %1109 = vmatprep.subr.bf16.mxu0 0
        %1110 = vmatpush1.bf16.msra.mxu0 0
        %1111 = vmatprep.subr.bf16.mxu0 0
        %1112 = vmatpush1.bf16.msra.mxu0 0
        %1113 = vmatprep.subr.bf16.mxu0 0
        %1114 = vmatpush1.bf16.msra.mxu0 0
        %1115 = vmatprep.subr.bf16.mxu0 0
        %1116 = vmatpush1.bf16.msra.mxu0 0
        %1117 = vmatprep.subr.bf16.mxu0 0
        %1118 = vmatpush1.bf16.msra.mxu0 0
        %1119 = vmatprep.subr.bf16.mxu0 0
        %1120 = vmatpush1.bf16.msra.mxu0 0
        %1121 = vmatprep.subr.bf16.mxu0 0
        %1122 = vmatpush1.bf16.msra.mxu0 0
        %1123 = vmatprep.mubr.bf16.mxu0 0
        %1124 = vmatmul.mubr.bf16.gmra.mrb[0].mxu0 %v1086
        %v1125 = vpop.f32.mrb[0].mxu0
        %v1126 = vadd.f32 0.0, %v1125
        %v1127 = vpop.f32.mrb[0].mxu0
        %v1128 = vpop.f32.mrb[0].mxu0
        %v1129 = vpop.f32.mrb[0].mxu0
        %1130 = vdwg.mxu0
        %v1132 = vsel %vm642, %v1078, 0
        %v1135 = vsel %vm889, %v1082, 0
        %1137 = vmatprep.subr.bf16.mxu0 0
        %1138 = vmatpush1.bf16.msra.mxu0 %v1135
        %1139 = vmatprep.subr.bf16.mxu0 0
        %1140 = vmatpush1.bf16.msra.mxu0 0
        %1141 = vmatprep.subr.bf16.mxu0 0
        %1142 = vmatpush1.bf16.msra.mxu0 0
        %1143 = vmatprep.subr.bf16.mxu0 0
        %1144 = vmatpush1.bf16.msra.mxu0 0
        %1145 = vmatprep.subr.bf16.mxu0 0
        %1146 = vmatpush1.bf16.msra.mxu0 0
        %1147 = vmatprep.subr.bf16.mxu0 0
        %1148 = vmatpush1.bf16.msra.mxu0 0
        %1149 = vmatprep.subr.bf16.mxu0 0
        %1150 = vmatpush1.bf16.msra.mxu0 0
        %1151 = vmatprep.subr.bf16.mxu0 0
        %1152 = vmatpush1.bf16.msra.mxu0 0
        %1153 = vmatprep.subr.bf16.mxu0 0
        %1154 = vmatpush1.bf16.msra.mxu0 0
        %1155 = vmatprep.subr.bf16.mxu0 0
        %1156 = vmatpush1.bf16.msra.mxu0 0
        %1157 = vmatprep.subr.bf16.mxu0 0
        %1158 = vmatpush1.bf16.msra.mxu0 0
        %1159 = vmatprep.subr.bf16.mxu0 0
        %1160 = vmatpush1.bf16.msra.mxu0 0
        %1161 = vmatprep.subr.bf16.mxu0 0
        %1162 = vmatpush1.bf16.msra.mxu0 0
        %1163 = vmatprep.subr.bf16.mxu0 0
        %1164 = vmatpush1.bf16.msra.mxu0 0
        %1165 = vmatprep.subr.bf16.mxu0 0
        %1166 = vmatpush1.bf16.msra.mxu0 0
        %1167 = vmatprep.subr.bf16.mxu0 0
        %1168 = vmatpush1.bf16.msra.mxu0 0
        %1169 = vmatprep.mubr.bf16.mxu0 0
        %1170 = vmatmul.mubr.bf16.gmra.mrb[0].mxu0 %v1132
        %v1171 = vpop.f32.mrb[0].mxu0
        %v1172 = vadd.f32 0.0, %v1171
        %v1173 = vpop.f32.mrb[0].mxu0
        %v1174 = vpop.f32.mrb[0].mxu0
        %v1175 = vpop.f32.mrb[0].mxu0
        %1176 = vdwg.mxu0
        %v1178 = vsel %vm642, %v1079, 0
        %v1181 = vsel %vm889, %v1083, 0
        %1183 = vmatprep.subr.bf16.mxu0 0
        %1184 = vmatpush1.bf16.msra.mxu0 %v1181
        %1185 = vmatprep.subr.bf16.mxu0 0
        %1186 = vmatpush1.bf16.msra.mxu0 0
        %1187 = vmatprep.subr.bf16.mxu0 0
        %1188 = vmatpush1.bf16.msra.mxu0 0
        %1189 = vmatprep.subr.bf16.mxu0 0
        %1190 = vmatpush1.bf16.msra.mxu0 0
        %1191 = vmatprep.subr.bf16.mxu0 0
        %1192 = vmatpush1.bf16.msra.mxu0 0
        %1193 = vmatprep.subr.bf16.mxu0 0
        %1194 = vmatpush1.bf16.msra.mxu0 0
        %1195 = vmatprep.subr.bf16.mxu0 0
        %1196 = vmatpush1.bf16.msra.mxu0 0
        %1197 = vmatprep.subr.bf16.mxu0 0
        %1198 = vmatpush1.bf16.msra.mxu0 0
        %1199 = vmatprep.subr.bf16.mxu0 0
        %1200 = vmatpush1.bf16.msra.mxu0 0
        %1201 = vmatprep.subr.bf16.mxu0 0
        %1202 = vmatpush1.bf16.msra.mxu0 0
        %1203 = vmatprep.subr.bf16.mxu0 0
        %1204 = vmatpush1.bf16.msra.mxu0 0
        %1205 = vmatprep.subr.bf16.mxu0 0
        %1206 = vmatpush1.bf16.msra.mxu0 0
        %1207 = vmatprep.subr.bf16.mxu0 0
        %1208 = vmatpush1.bf16.msra.mxu0 0
        %1209 = vmatprep.subr.bf16.mxu0 0
        %1210 = vmatpush1.bf16.msra.mxu0 0
        %1211 = vmatprep.subr.bf16.mxu0 0
        %1212 = vmatpush1.bf16.msra.mxu0 0
        %1213 = vmatprep.subr.bf16.mxu0 0
        %1214 = vmatpush1.bf16.msra.mxu0 0
        %1215 = vmatprep.mubr.bf16.mxu0 0
        %1216 = vmatmul.mubr.bf16.gmra.mrb[0].mxu0 %v1178
        %v1217 = vpop.f32.mrb[0].mxu0
        %v1218 = vadd.f32 0.0, %v1217
        %v1219 = vpop.f32.mrb[0].mxu0
        %v1220 = vpop.f32.mrb[0].mxu0
        %v1221 = vpop.f32.mrb[0].mxu0
        %1222 = vdwg.mxu0
        %v1224 = vsel %vm642, %v1080, 0
        %v1227 = vsel %vm889, %v1084, 0
        %1229 = vmatprep.subr.bf16.mxu0 0
        %1230 = vmatpush1.bf16.msra.mxu0 %v1227
        %1231 = vmatprep.subr.bf16.mxu0 0
        %1232 = vmatpush1.bf16.msra.mxu0 0
        %1233 = vmatprep.subr.bf16.mxu0 0
        %1234 = vmatpush1.bf16.msra.mxu0 0
        %1235 = vmatprep.subr.bf16.mxu0 0
        %1236 = vmatpush1.bf16.msra.mxu0 0
        %1237 = vmatprep.subr.bf16.mxu0 0
        %1238 = vmatpush1.bf16.msra.mxu0 0
        %1239 = vmatprep.subr.bf16.mxu0 0
        %1240 = vmatpush1.bf16.msra.mxu0 0
        %1241 = vmatprep.subr.bf16.mxu0 0
        %1242 = vmatpush1.bf16.msra.mxu0 0
        %1243 = vmatprep.subr.bf16.mxu0 0
        %1244 = vmatpush1.bf16.msra.mxu0 0
        %1245 = vmatprep.subr.bf16.mxu0 0
        %1246 = vmatpush1.bf16.msra.mxu0 0
        %1247 = vmatprep.subr.bf16.mxu0 0
        %1248 = vmatpush1.bf16.msra.mxu0 0
        %1249 = vmatprep.subr.bf16.mxu0 0
        %1250 = vmatpush1.bf16.msra.mxu0 0
        %1251 = vmatprep.subr.bf16.mxu0 0
        %1252 = vmatpush1.bf16.msra.mxu0 0
        %1253 = vmatprep.subr.bf16.mxu0 0
        %1254 = vmatpush1.bf16.msra.mxu0 0
        %1255 = vmatprep.subr.bf16.mxu0 0
        %1256 = vmatpush1.bf16.msra.mxu0 0
        %1257 = vmatprep.subr.bf16.mxu0 0
        %1258 = vmatpush1.bf16.msra.mxu0 0
        %1259 = vmatprep.subr.bf16.mxu0 0
        %1260 = vmatpush1.bf16.msra.mxu0 0
        %1261 = vmatprep.mubr.bf16.mxu0 0
        %1262 = vmatmul.mubr.bf16.gmra.mrb[0].mxu0 %v1224
        %v1263 = vpop.f32.mrb[0].mxu0
        %v1264 = vadd.f32 0.0, %v1263
        %v1265 = vpop.f32.mrb[0].mxu0
        %v1266 = vpop.f32.mrb[0].mxu0
        %v1267 = vpop.f32.mrb[0].mxu0
        %1268 = vdwg.mxu0
        %v1269 = vsel %vm345, %v1126, 0.0
        %v1270 = vsel %vm345, %v1172, 0.0
        %v1271 = vadd.f32 %v1269, %v1270
        %v1272 = vsel %vm345, %v1218, 0.0
        %v1273 = vadd.f32 %v1271, %v1272
        %v1274 = vsel %vm345, %v1264, 0.0
        %v1275 = vadd.f32 %v1273, %v1274
        %v1276 = vlaneseq
        %v1277 = vshrl.u32 %v1276, 7
        %v1278 = vsub.s32 2, %v1277
        %v1279 = vrot.slane %v342, %v1278
        %v1280 = vadd.f32 %v1275, %v1279
        %v1281 = vadd.f32 %v369, %v1280
        %v1282 = vsel %vm345, %v1281, 0.0
        %1283 = vadd.xlane.f32.xlu0 %v1282
        %v1284 = vpop.xlane.xlu0 %1283
        %v1285 = vmul.f32 %v1284, %v349
        %v1286 = vsub.f32 %v1281, %v1285
        %v1287 = vmul.f32 %v1286, %v1286
        %v1288 = vsel %vm345, %v1287, 0.0
        %1289 = vadd.xlane.f32.xlu0 %v1288
        %v1290 = vpop.xlane.xlu0 %1289
        %v1291 = vmul.f32 %v1290, %v349
        %v1292 = vadd.f32 %v1291, 1e-12
        %v1293 = vrsqrt.pop %v1292
        %v1294 = vmul.f32 %v1286, %v1293
        %v1295 = vlaneseq
        %v1296 = vshrl.u32 %v1295, 7
        %v1297 = vsub.s32 3, %v1296
        %v1298 = vrot.slane %v342, %v1297
        %v1299 = vmul.f32 %v1294, %v1298
        %v1300 = vlaneseq
        %v1301 = vshrl.u32 %v1300, 7
        %v1302 = vsub.s32 4, %v1301
        %v1303 = vrot.slane %v342, %v1302
        %v1304 = vadd.f32 %v1299, %v1303
        %v1305 = vpack.c.bf16 %v1304, %v1304
        %v1306 = vld [vmem:[%s6] sm:$0xf]
        %v1307 = vld [vmem:[%s6 + $0x4] sm:$0xf]
        %v1308 = vld [vmem:[%s6 + $0x8] sm:$0xf]
        %v1309 = vld [vmem:[%s6 + $0xc] sm:$0xf]
        %v1310 = vlaneseq
        %v1311 = vshrl.u32 %v1310, 7
        %v1312 = vsub.s32 5, %v1311
        %v1313 = vrot.slane %v342, %v1312
        %v1318 = vunpack.c.l.b16 %v1306
        %v1319 = vunpack.c.l.b16 %v1307
        %v1320 = vunpack.c.l.b16 %v1308
        %v1321 = vunpack.c.l.b16 %v1309
        %v1322 = vpack.c.b16 %v1319, %v1318
        %v1323 = vpack.c.b16 %v1321, %v1320
        %v1327 = vsel %vm345, %v1305, 0
        %1329 = vmatprep.subr.bf16.mxu0 0
        %1330 = vmatpush1.bf16.msra.mxu0 %v1322
        %1331 = vmatprep.subr.bf16.mxu0 0
        %1332 = vmatpush1.bf16.msra.mxu0 %v1323
        %1333 = vmatprep.subr.bf16.mxu0 0
        %1334 = vmatpush1.bf16.msra.mxu0 0
        %1335 = vmatprep.subr.bf16.mxu0 0
        %1336 = vmatpush1.bf16.msra.mxu0 0
        %1337 = vmatprep.subr.bf16.mxu0 0
        %1338 = vmatpush1.bf16.msra.mxu0 0
        %1339 = vmatprep.subr.bf16.mxu0 0
        %1340 = vmatpush1.bf16.msra.mxu0 0
        %1341 = vmatprep.subr.bf16.mxu0 0
        %1342 = vmatpush1.bf16.msra.mxu0 0
        %1343 = vmatprep.subr.bf16.mxu0 0
        %1344 = vmatpush1.bf16.msra.mxu0 0
        %1345 = vmatprep.subr.bf16.mxu0 0
        %1346 = vmatpush1.bf16.msra.mxu0 0
        %1347 = vmatprep.subr.bf16.mxu0 0
        %1348 = vmatpush1.bf16.msra.mxu0 0
        %1349 = vmatprep.subr.bf16.mxu0 0
        %1350 = vmatpush1.bf16.msra.mxu0 0
        %1351 = vmatprep.subr.bf16.mxu0 0
        %1352 = vmatpush1.bf16.msra.mxu0 0
        %1353 = vmatprep.subr.bf16.mxu0 0
        %1354 = vmatpush1.bf16.msra.mxu0 0
        %1355 = vmatprep.subr.bf16.mxu0 0
        %1356 = vmatpush1.bf16.msra.mxu0 0
        %1357 = vmatprep.subr.bf16.mxu0 0
        %1358 = vmatpush1.bf16.msra.mxu0 0
        %1359 = vmatprep.subr.bf16.mxu0 0
        %1360 = vmatpush1.bf16.msra.mxu0 0
        %1361 = vmatprep.mubr.bf16.mxu0 0
        %1362 = vmatmul.mubr.bf16.gmra.mrb[0].mxu0 %v1327
        %v1363 = vpop.f32.mrb[0].mxu0
        %v1364 = vadd.f32 %v1313, %v1363
        %v1365 = vpop.f32.mrb[0].mxu0
        %v1366 = vpop.f32.mrb[0].mxu0
        %v1367 = vpop.f32.mrb[0].mxu0
        %1368 = vdwg.mxu0
        %v1369 = vmul.f32 %v1364, %v1364
        %v1370 = vmul.f32 %v1364, %v1369
        %v1371 = vmul.f32 %v1370, 0.044715
        %v1372 = vadd.f32 %v1364, %v1371
        %v1373 = vmul.f32 %v1372, 0.7978846
        %v1374 = vtanh.pop %v1373
        %v1375 = vadd.f32 %v1374, 1.0
        %v1376 = vmul.f32 %v1375, 0.5
        %v1377 = vmul.f32 %v1364, %v1376
        %v1378 = vpack.c.bf16 %v1377, %v1377
        %v1379 = vld [vmem:[%s7] sm:$0xf]
        %v1380 = vld [vmem:[%s7 + $0x4] sm:$0xf]
        %v1381 = vld [vmem:[%s7 + $0x8] sm:$0xf]
        %v1382 = vld [vmem:[%s7 + $0xc] sm:$0xf]
        %v1383 = vld [vmem:[%s7 + $0x10] sm:$0xf]
        %v1384 = vld [vmem:[%s7 + $0x14] sm:$0xf]
        %v1385 = vld [vmem:[%s7 + $0x18] sm:$0xf]
        %v1386 = vld [vmem:[%s7 + $0x1c] sm:$0xf]
        %v1387 = vlaneseq
        %v1388 = vshrl.u32 %v1387, 7
        %v1389 = vsub.s32 6, %v1388
        %v1390 = vrot.slane %v342, %v1389
        %v1399 = vunpack.c.l.b16 %v1379
        %v1400 = vunpack.c.l.b16 %v1380
        %v1401 = vunpack.c.l.b16 %v1381
        %v1402 = vunpack.c.l.b16 %v1382
        %v1403 = vunpack.c.l.b16 %v1383
        %v1404 = vunpack.c.l.b16 %v1384
        %v1405 = vunpack.c.l.b16 %v1385
        %v1406 = vunpack.c.l.b16 %v1386
        %v1407 = vpack.c.b16 %v1400, %v1399
        %v1408 = vpack.c.b16 %v1402, %v1401
        %v1409 = vpack.c.b16 %v1404, %v1403
        %v1410 = vpack.c.b16 %v1406, %v1405
        %vm1415 = vcmask 523264
        %v1417 = vsel %vm1415, %v1378, 0
        %1419 = vmatprep.subr.bf16.mxu0 0
        %1420 = vmatpush1.bf16.msra.mxu0 %v1407
        %1421 = vmatprep.subr.bf16.mxu0 0
        %1422 = vmatpush1.bf16.msra.mxu0 %v1408
        %1423 = vmatprep.subr.bf16.mxu0 0
        %1424 = vmatpush1.bf16.msra.mxu0 %v1409
        %1425 = vmatprep.subr.bf16.mxu0 0
        %1426 = vmatpush1.bf16.msra.mxu0 %v1410
        %1427 = vmatprep.subr.bf16.mxu0 0
        %1428 = vmatpush1.bf16.msra.mxu0 0
        %1429 = vmatprep.subr.bf16.mxu0 0
        %1430 = vmatpush1.bf16.msra.mxu0 0
        %1431 = vmatprep.subr.bf16.mxu0 0
        %1432 = vmatpush1.bf16.msra.mxu0 0
        %1433 = vmatprep.subr.bf16.mxu0 0
        %1434 = vmatpush1.bf16.msra.mxu0 0
        %1435 = vmatprep.subr.bf16.mxu0 0
        %1436 = vmatpush1.bf16.msra.mxu0 0
        %1437 = vmatprep.subr.bf16.mxu0 0
        %1438 = vmatpush1.bf16.msra.mxu0 0
        %1439 = vmatprep.subr.bf16.mxu0 0
        %1440 = vmatpush1.bf16.msra.mxu0 0
        %1441 = vmatprep.subr.bf16.mxu0 0
        %1442 = vmatpush1.bf16.msra.mxu0 0
        %1443 = vmatprep.subr.bf16.mxu0 0
        %1444 = vmatpush1.bf16.msra.mxu0 0
        %1445 = vmatprep.subr.bf16.mxu0 0
        %1446 = vmatpush1.bf16.msra.mxu0 0
        %1447 = vmatprep.subr.bf16.mxu0 0
        %1448 = vmatpush1.bf16.msra.mxu0 0
        %1449 = vmatprep.subr.bf16.mxu0 0
        %1450 = vmatpush1.bf16.msra.mxu0 0
        %1451 = vmatprep.mubr.bf16.mxu0 0
        %1452 = vmatmul.mubr.bf16.gmra.mrb[0].mxu0 %v1417
        %v1453 = vpop.f32.mrb[0].mxu0
        %v1454 = vadd.f32 %v1390, %v1453
        %v1455 = vpop.f32.mrb[0].mxu0
        %v1456 = vpop.f32.mrb[0].mxu0
        %v1457 = vpop.f32.mrb[0].mxu0
        %1458 = vdwg.mxu0
        %v1459 = vadd.f32 %v1304, %v1454
        %v1460 = vsel %vm345, %v1459, 0.0
        %1461 = vadd.xlane.f32.xlu0 %v1460
        %v1462 = vpop.xlane.xlu0 %1461
        %v1463 = vmul.f32 %v1462, %v349
        %v1464 = vsub.f32 %v1459, %v1463
        %v1465 = vmul.f32 %v1464, %v1464
        %v1466 = vsel %vm345, %v1465, 0.0
        %1467 = vadd.xlane.f32.xlu0 %v1466
        %v1468 = vpop.xlane.xlu0 %1467
        %v1469 = vmul.f32 %v1468, %v349
        %v1470 = vadd.f32 %v1469, 1e-12
        %v1471 = vrsqrt.pop %v1470
        %v1472 = vmul.f32 %v1464, %v1471
        %v1473 = vlaneseq
        %v1474 = vshrl.u32 %v1473, 7
        %v1475 = vsub.s32 7, %v1474
        %v1476 = vrot.slane %v342, %v1475
        %v1477 = vmul.f32 %v1472, %v1476
        %v1478 = vlaneseq
        %v1479 = vshrl.u32 %v1478, 7
        %v1480 = vsub.s32 0, %v1479
        %v1481 = vrot.slane %v343, %v1480
        %v1482 = vadd.f32 %v1477, %v1481
        %v1483 = vsel %vm345, %v1482, 0.0
        %v1484 = vrot.slane %v1483, 4
        %v1485 = vadd.f32 %v1483, %v1484
        %v1486 = vrot.slane %v1485, 2
        %v1487 = vadd.f32 %v1485, %v1486
        %v1488 = vrot.slane %v1487, 1
        %v1489 = vadd.f32 %v1487, %v1488
        %v1490 = vrcp.pop 8.0
        %v1491 = vmul.f32 %v1489, %v1490
        %v1492 = vpack.c.bf16 %v1491, %v1491
        %v1493 = vld [vmem:[%s8] sm:$0xf]
        %v1494 = vld [vmem:[%s8 + $0x4] sm:$0xf]
        %v1495 = vld [vmem:[%s8 + $0x8] sm:$0xf]
        %v1496 = vld [vmem:[%s8 + $0xc] sm:$0xf]
        %v1501 = vunpack.c.l.b16 %v1493
        %v1502 = vunpack.c.l.b16 %v1494
        %v1503 = vunpack.c.l.b16 %v1495
        %v1504 = vunpack.c.l.b16 %v1496
        %v1505 = vpack.c.b16 %v1502, %v1501
        %v1506 = vpack.c.b16 %v1504, %v1503
        %v1510 = vrot.slane %v343, 1
        %v1513 = vsel %vm345, %v1492, 0
        %1515 = vmatprep.subr.bf16.mxu0 0
        %1516 = vmatpush1.bf16.msra.mxu0 %v1505
        %1517 = vmatprep.subr.bf16.mxu0 0
        %1518 = vmatpush1.bf16.msra.mxu0 %v1506
        %1519 = vmatprep.subr.bf16.mxu0 0
        %1520 = vmatpush1.bf16.msra.mxu0 0
        %1521 = vmatprep.subr.bf16.mxu0 0
        %1522 = vmatpush1.bf16.msra.mxu0 0
        %1523 = vmatprep.subr.bf16.mxu0 0
        %1524 = vmatpush1.bf16.msra.mxu0 0
        %1525 = vmatprep.subr.bf16.mxu0 0
        %1526 = vmatpush1.bf16.msra.mxu0 0
        %1527 = vmatprep.subr.bf16.mxu0 0
        %1528 = vmatpush1.bf16.msra.mxu0 0
        %1529 = vmatprep.subr.bf16.mxu0 0
        %1530 = vmatpush1.bf16.msra.mxu0 0
        %1531 = vmatprep.subr.bf16.mxu0 0
        %1532 = vmatpush1.bf16.msra.mxu0 0
        %1533 = vmatprep.subr.bf16.mxu0 0
        %1534 = vmatpush1.bf16.msra.mxu0 0
        %1535 = vmatprep.subr.bf16.mxu0 0
        %1536 = vmatpush1.bf16.msra.mxu0 0
        %1537 = vmatprep.subr.bf16.mxu0 0
        %1538 = vmatpush1.bf16.msra.mxu0 0
        %1539 = vmatprep.subr.bf16.mxu0 0
        %1540 = vmatpush1.bf16.msra.mxu0 0
        %1541 = vmatprep.subr.bf16.mxu0 0
        %1542 = vmatpush1.bf16.msra.mxu0 0
        %1543 = vmatprep.subr.bf16.mxu0 0
        %1544 = vmatpush1.bf16.msra.mxu0 0
        %1545 = vmatprep.subr.bf16.mxu0 0
        %1546 = vmatpush1.bf16.msra.mxu0 0
        %1547 = vmatprep.mubr.bf16.mxu0 0
        %1548 = vmatmul.mubr.bf16.gmra.mrb[0].mxu0 %v1513
        %v1549 = vpop.f32.mrb[0].mxu0
        %v1550 = vadd.f32 %v1510, %v1549
        %v1551 = vpop.f32.mrb[0].mxu0
        %v1552 = vpop.f32.mrb[0].mxu0
        %v1553 = vpop.f32.mrb[0].mxu0
        %1554 = vdwg.mxu0
        %vm1555 = vcmask 1040384
        %v1556 = vsel %vm1555, %v1550, -inf
        %1557 = vmax.xlane.f32.xlu0 %v1556
        %v1558 = vpop.xlane.xlu0 %1557
        %v1559 = vsub.f32 %v1550, %v1558
        %v1560 = vmul.f32 %v1559, 1.442695
        %v1561 = vpow.pop %v1560
        %v1562 = vsel %vm1555, %v1561, 0.0
        %1563 = vadd.xlane.f32.xlu0 %v1562
        %v1564 = vpop.xlane.xlu0 %1563
        %v1565 = vlog2.pop %v1564
        %v1566 = vmul.f32 %v1565, 0.6931472
        %v1567 = vsub.f32 %v1559, %v1566
        %1568 = vst [vmem:[%s333] sm:$0x1] %v1567
        %s1569 = sand.u32 %s230, 1
        %s1570 = scalar_lea.sflag [#allocation3], %s1569
        %s1571 = sand.u32 %s230, 1
        %s1572 = scalar_lea.vmem [#allocation2], %s1571
        // Predicated region
        $region57: #{bert_classifier_forward.1} parent=55 // pred_check
          %p1573 = pneg %p240
        $region58: #{bert_classifier_forward.1} parent=55 // pred_check_branch
          %1575 = sbr.rel (%p1573) target = $region60
        $region59: #{bert_classifier_forward.1} parent=55 // pred_region
          %s1577 = ssub.s32 16, 16
          %1578 = vsyncadd %s1570, %s1577
          %s1579 = smul.addr %s23, 16
          %s1580 = scalar_lea.hbm %s9, %s1579
          %s1582 = sshll.u32 %s1572, 4
          %s1583 = int_to_ptr.vmem [resolvable:$true] %s1582
          %1585 = dma.vmem_to_hbm [thread:$0]  %s1583, 16, %s1580, %s1570
        $region60: #{bert_classifier_forward.1} parent=55 // pred_fallthru
          _
      $region56: #{bert_classifier_forward.1} parent=5 // pred_fallthru
        _
      %p1586 = scmp.le.s32.totalorder 2, %s18
      // Predicated region
      $region61: #{bert_classifier_forward.1} parent=5 // pred_check
        %p1587 = pneg %p1586
      $region62: #{bert_classifier_forward.1} parent=5 // pred_check_branch
        %1589 = sbr.rel (%p1587) target = $region64
      $region63: #{bert_classifier_forward.1} parent=5 // pred_region
        %s1590 = ssub.s32 %s18, 2
        // Predicated region
        $region65: #{bert_classifier_forward.1} parent=63 // pred_check
          %p1591 = pneg %p246
        $region66: #{bert_classifier_forward.1} parent=63 // pred_check_branch
          %1593 = sbr.rel (%p1591) target = $region68
        $region67: #{bert_classifier_forward.1} parent=63 // pred_region
          %s1594 = sand.u32 %s231, 1
          %s1595 = scalar_lea.sflag [#allocation3], %s1594
          %s1596 = sand.u32 %s231, 1
          %s1597 = scalar_lea.vmem [#allocation2], %s1596
          %1598 = dma.done %s1595, 16
        $region68: #{bert_classifier_forward.1} parent=63 // pred_fallthru
          _
      $region64: #{bert_classifier_forward.1} parent=5 // pred_fallthru
        _
    $region6: #{bert_classifier_forward.1} parent=1 // loop_footer
      %s22 = sadd.s32 1, %s18
    $region7: #{bert_classifier_forward.1} parent=1 // loop_footer_branch
      %17 = sbr.rel target = $region3
    $region8: #{bert_classifier_forward.1} parent=1 // loop_exit
      _
    %1599 = vsyncpa [#allocation3], 1
    %s1600 = scalar_lea.sflag [#allocation3], 1
    %1601 = vsyncpa %s1600, 1

</llo_original>
